<compile_context>
chip_gen: v5e
topology: v5e:2x2
jax: 0.10.0
libtpu: 0.0.40
codegen_flags: <defaults>
</compile_context>

<pallas_src>
import jax
import jax.numpy as jnp
from jax.experimental import pallas as pl
from jax.experimental.pallas import tpu as pltpu


def se_kernel(x_ref, pw1_ref, b1_ref, w2_ref, b2_ref, bcast_ref, o_ref):
    # x_ref:     (TN, D)   with D = C*HW  (lane-dense)
    # pw1_ref:   (D, Cr)   fused avg-pool + linear1 weights (pool_w @ w1^T)
    # b1_ref:    (1, Cr)
    # w2_ref:    (Cr, C)   b2_ref: (1, C)
    # bcast_ref: (C, D)    bcast_ref[c, c*HW + j] = 1  (gate broadcast, bf16)
    # o_ref:     (TN, D)

    # Fused global-average-pool + linear1 (+ ReLU), f32 accumulation on the MXU.
    y1 = jnp.dot(x_ref[...], pw1_ref[...], preferred_element_type=jnp.float32)
    y1 = jnp.maximum(y1 + b1_ref[...], 0.0)                                  # (TN, Cr)

    # linear2 + sigmoid -> per-channel gates.
    y2 = jnp.dot(y1, w2_ref[...], preferred_element_type=jnp.float32) + b2_ref[...]
    y2 = jax.nn.sigmoid(y2)                                                  # (TN, C)

    # Chunked gate expansion + rescale: never materialize a full (TN, D) f32
    # `scale`; each chunk's gate matmul feeds its store immediately.
    D = o_ref.shape[1]
    chunk = D
    for c in (512, 256, 128):
        if D % c == 0:
            chunk = c
            break
    for c0 in range(0, D, chunk):
        sl = slice(c0, c0 + chunk)
        gate = jnp.dot(y2, bcast_ref[:, sl].astype(jnp.float32),
                       preferred_element_type=jnp.float32)                   # (TN, chunk)
        o_ref[:, sl] = (x_ref[:, sl] * gate).astype(o_ref.dtype)


def prepare_se_params(w1, b1, w2, b2, H, W):
    """One-time parameter prep (hoisted out of the forward path).

    w1: (Cr, C), b1: (Cr,), w2: (C, Cr), b2: (C,)  -- nn.Linear layout.
    """
    Cr, C = w1.shape
    HW = H * W
    eye = jnp.eye(C, dtype=jnp.float32)
    pool_w = jnp.repeat(eye, HW, axis=0) / float(HW)          # (D, C): avg-pool matrix
    pw1 = pool_w @ jnp.transpose(w1).astype(jnp.float32)      # (D, Cr): pool fused into linear1
    bcast_w = jnp.repeat(eye, HW, axis=1).astype(jnp.bfloat16)  # (C, D): {0,1} exact in bf16
    return dict(
        pw1=pw1.astype(jnp.float32),
        b1r=b1.reshape(1, Cr).astype(jnp.float32),
        w2t=jnp.transpose(w2).astype(jnp.float32),             # (Cr, C)
        b2r=b2.reshape(1, C).astype(jnp.float32),
        bcast_w=bcast_w,
    )


def _choose_batch_tile(n, row_bytes, target_bytes=2 << 20):
    """Rows per grid step: ~2 MiB of x per tile (safe on v5e scoped VMEM while
    keeping per-step overhead small on v6e/v7x), sublane multiple of 8, never
    larger than the array itself (tail block handles non-divisible N)."""
    if n <= 8:
        return n
    tn = max(8, target_bytes // max(row_bytes, 1))
    tn = min(tn, (n // 8) * 8)
    return int((tn // 8) * 8)


def se_forward(x, params, *, tn=None):
    """x: (N, C, H, W). Returns x * sigmoid(linear2(relu(linear1(avgpool(x)))))."""
    N, C, H, W = x.shape
    D = C * H * W
    Cr = params["pw1"].shape[1]

    if tn is None:
        tn = _choose_batch_tile(N, D * x.dtype.itemsize)

    xf = x.reshape(N, D)             # lane-dense layout; no pad, no post-slice
    grid = (pl.cdiv(N, tn),)         # tail block (if any) is masked by Pallas

    out = pl.pallas_call(
        se_kernel,
        out_shape=jax.ShapeDtypeStruct((N, D), x.dtype),
        grid_spec=pltpu.PrefetchScalarGridSpec(
            num_scalar_prefetch=0,
            grid=grid,
            in_specs=[
                pl.BlockSpec((tn, D), lambda i: (i, 0)),   # x tile (lane-dense)
                pl.BlockSpec((D, Cr), lambda i: (0, 0)),   # fused pool+linear1 weights
                pl.BlockSpec((1, Cr), lambda i: (0, 0)),   # b1
                pl.BlockSpec((Cr, C), lambda i: (0, 0)),   # w2^T
                pl.BlockSpec((1, C), lambda i: (0, 0)),    # b2
                pl.BlockSpec((C, D), lambda i: (0, 0)),    # gate broadcast matrix (bf16)
            ],
            out_specs=pl.BlockSpec((tn, D), lambda i: (i, 0)),
        ),
        compiler_params=pltpu.CompilerParams(
            dimension_semantics=("parallel",),
            vmem_limit_bytes=32 << 20,
        ),
    )(xf, params["pw1"], params["b1r"], params["w2t"], params["b2r"],
      params["bcast_w"])

    return out.reshape(N, C, H, W)


def se_reference(x, w1, b1, w2, b2):
    """Pure-JAX reference mirroring the PyTorch forward pass exactly."""
    pooled = jnp.mean(x, axis=(2, 3))                     # (N, C)
    y = jnp.maximum(pooled @ w1.T + b1, 0.0)              # (N, Cr)
    y = jax.nn.sigmoid(y @ w2.T + b2)                     # (N, C)
    return x * y[:, :, None, None]


if __name__ == "__main__":
    n_features = 32
    reduction = 2
    Cr = n_features // reduction

    # N chosen so the batch does NOT divide the tile size -> exercises the
    # masked tail-block path that replaced the old pad/slice wrapper.
    N, C, H, W = 20, n_features, 8, 8

    key = jax.random.PRNGKey(0)
    kx, kw1, kb1, kw2, kb2 = jax.random.split(key, 5)

    x = jax.random.normal(kx, (N, C, H, W), dtype=jnp.float32)
    # parameters in nn.Linear layout: weight (out, in), bias (out,)
    w1 = jax.random.normal(kw1, (Cr, C), dtype=jnp.float32) * 0.1
    b1 = jax.random.normal(kb1, (Cr,), dtype=jnp.float32) * 0.1
    w2 = jax.random.normal(kw2, (C, Cr), dtype=jnp.float32) * 0.1
    b2 = jax.random.normal(kb2, (C,), dtype=jnp.float32) * 0.1

    params = prepare_se_params(w1, b1, w2, b2, H, W)   # hoisted one-time prep

    out = se_forward(x, params)
    out = jax.block_until_ready(out)

    ref = se_reference(x, w1, b1, w2, b2)
    assert out.shape == (N, C, H, W)
    assert jnp.allclose(out, ref, atol=1e-4, rtol=1e-4), "mismatch vs reference"

    print("KERNEL_OK")
</pallas_src>

<mosaic_0001>
module attributes {stable_mosaic.version = 11 : i64} {
  func.func @se_kernel(%arg0: i32, %arg1: memref<16x2048xf32, #tpu.memory_space<vmem>>, %arg2: memref<2048x16xf32, #tpu.memory_space<vmem>>, %arg3: memref<1x16xf32, #tpu.memory_space<vmem>>, %arg4: memref<16x32xf32, #tpu.memory_space<vmem>>, %arg5: memref<1x32xf32, #tpu.memory_space<vmem>>, %arg6: memref<32x2048xbf16, #tpu.memory_space<vmem>>, %arg7: memref<16x2048xf32, #tpu.memory_space<vmem>>) attributes {dimension_semantics = [#tpu.dimension_semantics<parallel>], iteration_bounds = array<i64: 2>, scalar_prefetch = 0 : i64, scratch_operands = 0 : i64, tpu.core_type = #tpu.core_type<tc>, window_params = [{transform_indices = @transform_0, window_bounds = array<i64: 16, 2048>}, {pipeline_mode = #tpu.pipeline_mode<synchronous>, transform_indices = @transform_1, window_bounds = array<i64: 2048, 16>}, {pipeline_mode = #tpu.pipeline_mode<synchronous>, transform_indices = @transform_2, window_bounds = array<i64: 1, 16>}, {pipeline_mode = #tpu.pipeline_mode<synchronous>, transform_indices = @transform_3, window_bounds = array<i64: 16, 32>}, {pipeline_mode = #tpu.pipeline_mode<synchronous>, transform_indices = @transform_4, window_bounds = array<i64: 1, 32>}, {pipeline_mode = #tpu.pipeline_mode<synchronous>, transform_indices = @transform_5, window_bounds = array<i64: 32, 2048>}, {transform_indices = @transform_6, window_bounds = array<i64: 16, 2048>}]} {
    %c0 = arith.constant 0 : index
    %c0_0 = arith.constant 0 : index
    %0 = vector.load %arg1[%c0, %c0_0] : memref<16x2048xf32, #tpu.memory_space<vmem>>, vector<16x2048xf32>
    %c0_1 = arith.constant 0 : index
    %c0_2 = arith.constant 0 : index
    %1 = vector.load %arg2[%c0_1, %c0_2] : memref<2048x16xf32, #tpu.memory_space<vmem>>, vector<2048x16xf32>
    %cst = arith.constant dense<0.000000e+00> : vector<16x16xf32>
    %2 = tpu.matmul %0, %1, %cst {dimension_numbers = #tpu.dot_dimension_numbers<[1], [0], [0], [1], [0, 0, 1, 1], [], []>} : vector<16x2048xf32>, vector<2048x16xf32>, vector<16x16xf32> -> vector<16x16xf32>
    %c0_3 = arith.constant 0 : index
    %c0_4 = arith.constant 0 : index
    %3 = vector.load %arg3[%c0_3, %c0_4] : memref<1x16xf32, #tpu.memory_space<vmem>>, vector<1x16xf32>
    %4 = vector.broadcast %3 : vector<1x16xf32> to vector<16x16xf32>
    %5 = arith.addf %2, %4 : vector<16x16xf32>
    %cst_5 = arith.constant 0.000000e+00 : f32
    %6 = vector.broadcast %cst_5 : f32 to vector<16x16xf32>
    %7 = arith.maximumf %5, %6 : vector<16x16xf32>
    %c0_6 = arith.constant 0 : index
    %c0_7 = arith.constant 0 : index
    %8 = vector.load %arg4[%c0_6, %c0_7] : memref<16x32xf32, #tpu.memory_space<vmem>>, vector<16x32xf32>
    %cst_8 = arith.constant dense<0.000000e+00> : vector<16x32xf32>
    %9 = tpu.matmul %7, %8, %cst_8 {dimension_numbers = #tpu.dot_dimension_numbers<[1], [0], [0], [1], [0, 0, 1, 1], [], []>} : vector<16x16xf32>, vector<16x32xf32>, vector<16x32xf32> -> vector<16x32xf32>
    %c0_9 = arith.constant 0 : index
    %c0_10 = arith.constant 0 : index
    %10 = vector.load %arg5[%c0_9, %c0_10] : memref<1x32xf32, #tpu.memory_space<vmem>>, vector<1x32xf32>
    %11 = vector.broadcast %10 : vector<1x32xf32> to vector<16x32xf32>
    %12 = arith.addf %9, %11 : vector<16x32xf32>
    %13 = arith.negf %12 : vector<16x32xf32>
    %14 = math.exp %13 : vector<16x32xf32>
    %cst_11 = arith.constant 1.000000e+00 : f32
    %15 = vector.broadcast %cst_11 : f32 to vector<16x32xf32>
    %16 = arith.addf %15, %14 : vector<16x32xf32>
    %17 = arith.divf %15, %16 : vector<16x32xf32>
    %c0_12 = arith.constant 0 : index
    %c0_13 = arith.constant 0 : index
    %18 = vector.load %arg6[%c0_12, %c0_13] : memref<32x2048xbf16, #tpu.memory_space<vmem>>, vector<32x512xbf16>
    %19 = arith.extf %18 : vector<32x512xbf16> to vector<32x512xf32>
    %cst_14 = arith.constant dense<0.000000e+00> : vector<16x512xf32>
    %20 = tpu.matmul %17, %19, %cst_14 {dimension_numbers = #tpu.dot_dimension_numbers<[1], [0], [0], [1], [0, 0, 1, 1], [], []>} : vector<16x32xf32>, vector<32x512xf32>, vector<16x512xf32> -> vector<16x512xf32>
    %c0_15 = arith.constant 0 : index
    %c0_16 = arith.constant 0 : index
    %21 = vector.load %arg1[%c0_15, %c0_16] : memref<16x2048xf32, #tpu.memory_space<vmem>>, vector<16x512xf32>
    %22 = arith.mulf %21, %20 : vector<16x512xf32>
    %c0_17 = arith.constant 0 : index
    %c0_18 = arith.constant 0 : index
    %23 = vector.load %arg7[%c0_17, %c0_18] : memref<16x2048xf32, #tpu.memory_space<vmem>>, vector<16x512xf32>
    tpu.vector_store %arg7[%c0_17, %c0_18], %22 {strides = array<i32>} : memref<16x2048xf32, #tpu.memory_space<vmem>>, vector<16x512xf32>,
    %c0_19 = arith.constant 0 : index
    %c512 = arith.constant 512 : index
    %24 = vector.load %arg6[%c0_19, %c512] : memref<32x2048xbf16, #tpu.memory_space<vmem>>, vector<32x512xbf16>
    %25 = arith.extf %24 : vector<32x512xbf16> to vector<32x512xf32>
    %cst_20 = arith.constant dense<0.000000e+00> : vector<16x512xf32>
    %26 = tpu.matmul %17, %25, %cst_20 {dimension_numbers = #tpu.dot_dimension_numbers<[1], [0], [0], [1], [0, 0, 1, 1], [], []>} : vector<16x32xf32>, vector<32x512xf32>, vector<16x512xf32> -> vector<16x512xf32>
    %c0_21 = arith.constant 0 : index
    %c512_22 = arith.constant 512 : index
    %27 = vector.load %arg1[%c0_21, %c512_22] : memref<16x2048xf32, #tpu.memory_space<vmem>>, vector<16x512xf32>
    %28 = arith.mulf %27, %26 : vector<16x512xf32>
    %c0_23 = arith.constant 0 : index
    %c512_24 = arith.constant 512 : index
    %29 = vector.load %arg7[%c0_23, %c512_24] : memref<16x2048xf32, #tpu.memory_space<vmem>>, vector<16x512xf32>
    tpu.vector_store %arg7[%c0_23, %c512_24], %28 {strides = array<i32>} : memref<16x2048xf32, #tpu.memory_space<vmem>>, vector<16x512xf32>,
    %c0_25 = arith.constant 0 : index
    %c1024 = arith.constant 1024 : index
    %30 = vector.load %arg6[%c0_25, %c1024] : memref<32x2048xbf16, #tpu.memory_space<vmem>>, vector<32x512xbf16>
    %31 = arith.extf %30 : vector<32x512xbf16> to vector<32x512xf32>
    %cst_26 = arith.constant dense<0.000000e+00> : vector<16x512xf32>
    %32 = tpu.matmul %17, %31, %cst_26 {dimension_numbers = #tpu.dot_dimension_numbers<[1], [0], [0], [1], [0, 0, 1, 1], [], []>} : vector<16x32xf32>, vector<32x512xf32>, vector<16x512xf32> -> vector<16x512xf32>
    %c0_27 = arith.constant 0 : index
    %c1024_28 = arith.constant 1024 : index
    %33 = vector.load %arg1[%c0_27, %c1024_28] : memref<16x2048xf32, #tpu.memory_space<vmem>>, vector<16x512xf32>
    %34 = arith.mulf %33, %32 : vector<16x512xf32>
    %c0_29 = arith.constant 0 : index
    %c1024_30 = arith.constant 1024 : index
    %35 = vector.load %arg7[%c0_29, %c1024_30] : memref<16x2048xf32, #tpu.memory_space<vmem>>, vector<16x512xf32>
    tpu.vector_store %arg7[%c0_29, %c1024_30], %34 {strides = array<i32>} : memref<16x2048xf32, #tpu.memory_space<vmem>>, vector<16x512xf32>,
    %c0_31 = arith.constant 0 : index
    %c1536 = arith.constant 1536 : index
    %36 = vector.load %arg6[%c0_31, %c1536] : memref<32x2048xbf16, #tpu.memory_space<vmem>>, vector<32x512xbf16>
    %37 = arith.extf %36 : vector<32x512xbf16> to vector<32x512xf32>
    %cst_32 = arith.constant dense<0.000000e+00> : vector<16x512xf32>
    %38 = tpu.matmul %17, %37, %cst_32 {dimension_numbers = #tpu.dot_dimension_numbers<[1], [0], [0], [1], [0, 0, 1, 1], [], []>} : vector<16x32xf32>, vector<32x512xf32>, vector<16x512xf32> -> vector<16x512xf32>
    %c0_33 = arith.constant 0 : index
    %c1536_34 = arith.constant 1536 : index
    %39 = vector.load %arg1[%c0_33, %c1536_34] : memref<16x2048xf32, #tpu.memory_space<vmem>>, vector<16x512xf32>
    %40 = arith.mulf %39, %38 : vector<16x512xf32>
    %c0_35 = arith.constant 0 : index
    %c1536_36 = arith.constant 1536 : index
    %41 = vector.load %arg7[%c0_35, %c1536_36] : memref<16x2048xf32, #tpu.memory_space<vmem>>, vector<16x512xf32>
    tpu.vector_store %arg7[%c0_35, %c1536_36], %40 {strides = array<i32>} : memref<16x2048xf32, #tpu.memory_space<vmem>>, vector<16x512xf32>,
    return
  }
  func.func @transform_0(%arg0: i32) -> (i32, i32) {
    %c0_i32 = arith.constant 0 : i32
    %c0_i32_0 = arith.constant 0 : i32
    return %arg0, %c0_i32 : i32, i32
  }
  func.func @transform_1(%arg0: i32) -> (i32, i32) {
    %c0_i32 = arith.constant 0 : i32
    %c0_i32_0 = arith.constant 0 : i32
    %c0_i32_1 = arith.constant 0 : i32
    return %c0_i32, %c0_i32_0 : i32, i32
  }
  func.func @transform_2(%arg0: i32) -> (i32, i32) {
    %c0_i32 = arith.constant 0 : i32
    %c0_i32_0 = arith.constant 0 : i32
    %c0_i32_1 = arith.constant 0 : i32
    return %c0_i32, %c0_i32_0 : i32, i32
  }
  func.func @transform_3(%arg0: i32) -> (i32, i32) {
    %c0_i32 = arith.constant 0 : i32
    %c0_i32_0 = arith.constant 0 : i32
    %c0_i32_1 = arith.constant 0 : i32
    return %c0_i32, %c0_i32_0 : i32, i32
  }
  func.func @transform_4(%arg0: i32) -> (i32, i32) {
    %c0_i32 = arith.constant 0 : i32
    %c0_i32_0 = arith.constant 0 : i32
    %c0_i32_1 = arith.constant 0 : i32
    return %c0_i32, %c0_i32_0 : i32, i32
  }
  func.func @transform_5(%arg0: i32) -> (i32, i32) {
    %c0_i32 = arith.constant 0 : i32
    %c0_i32_0 = arith.constant 0 : i32
    %c0_i32_1 = arith.constant 0 : i32
    return %c0_i32, %c0_i32_0 : i32, i32
  }
  func.func @transform_6(%arg0: i32) -> (i32, i32) {
    %c0_i32 = arith.constant 0 : i32
    %c0_i32_0 = arith.constant 0 : i32
    return %arg0, %c0_i32 : i32, i32
  }
}

</mosaic_0001>

<llo_original>
// kernel: tpu_custom_call.1
$region0: #{tpu_custom_call.1}
  #allocation0 [shape = 'u32[]', space=smem, size = 0x4, offset = 0x4, fixed_abs, tag = 'smem constant byte address 0x4 - core index']
  #allocation1 [shape = 'u32[72,128]{1,0:T(1,128)}', space=vmem, size = 0x9000, scoped, tag = 'internal scratch']
  %s0 = inlined_call_operand.vmem [shape: f32[20,2048], index: 0, kind: input, shape index: {}]
  %s1 = inlined_call_operand.vmem [shape: f32[2048,16], index: 1, kind: input, shape index: {}]
  %s2 = inlined_call_operand.vmem [shape: f32[1,16], index: 2, kind: input, shape index: {}]
  %s3 = inlined_call_operand.vmem [shape: f32[16,32], index: 3, kind: input, shape index: {}]
  %s4 = inlined_call_operand.vmem [shape: f32[1,32], index: 4, kind: input, shape index: {}]
  %s5 = inlined_call_operand.vmem [shape: bf16[32,2048], index: 5, kind: input, shape index: {}]
  %s6 = inlined_call_operand.hbm [shape: f32[20,2048], index: 6, kind: output, shape index: {}]
  %s7 = sld [smem:[#allocation0]]
  $region57: #{tpu_custom_call.1} parent=0
    _
  %s9 = ssub.s32 1, %s7
  %s10 = scalar_select 0, %s9, %s7
  $region1: #{tpu_custom_call.1} parent=0
    #allocation2 [shape = 'u8[262144]{0}', space=vmem, size = 0x40000, scoped, tag = 'output window, operand 0']
    #allocation3 [shape = 's32[2]{0}', space=sflag, size = 0x8, scoped, tag = 'scoped memory for tpu_custom_call.1']
    %11 = vsyncpa [#allocation3], 0
    %s12 = scalar_lea.sflag [#allocation3], 1
    %13 = vsyncpa %s12, 0
    loop: start=0, step=1, limit=4
    $region2: #{tpu_custom_call.1} parent=1 // loop_pre_header
      _
    $region3: #{tpu_custom_call.1} parent=1 // loop_header
      %s15 = sphi 0, %s19
      %p16 = scmp.ge.s32.totalorder %s15, 4
      %s25 = sphi 0, %s27
      %s28 = sphi 0, %s25
      %s29 = sphi 0, %s28
      %s45 = sphi 0, %s29
      %s49 = sphi 0, %s49
      %s51 = sphi 0, %s49
      %s52 = sphi 0, %s51
      %s66 = sphi 0, %s52
      %s70 = sphi 0, %s70
      %s72 = sphi 0, %s70
      %s73 = sphi 0, %s72
      %s87 = sphi 0, %s73
      %s91 = sphi 0, %s91
      %s93 = sphi 0, %s91
      %s94 = sphi 0, %s93
      %s108 = sphi 0, %s94
      %s112 = sphi 0, %s112
      %s114 = sphi 0, %s112
      %s115 = sphi 0, %s114
      %s129 = sphi 0, %s115
      %s133 = sphi 0, %s133
      %s135 = sphi 0, %s133
      %s136 = sphi 0, %s135
      %s150 = sphi 0, %s136
      %s156 = sphi 0, %s158
      %s159 = sphi 0, %s156
      %s160 = sphi 0, %s159
      %s176 = sphi 0, %s160
    $region4: #{tpu_custom_call.1} parent=1 // loop_header_branch
      %18 = sbr.rel (%p16) target = $region8
    $region5: #{tpu_custom_call.1} parent=1 // loop_body
      %s20 = ssub.s32 %s15, 1
      %s21 = ssub.s32 %s15, 2
      %s22 = sadd.s32 %s15, 1
      %s23 = ssub.s32 %s15, %s22
      %p24 = scmp.eq.s32.totalorder %s23, 0
      %s26 = sadd.s32 %s25, 1
      %s27 = scalar_select %p24, %s25, %s26
      %p30 = pneg %p24
      %p31 = scmp.eq.s32.totalorder %s15, 1
      %p32 = por %p30, %p31
      %p33 = scmp.ne.s32.totalorder %s25, %s28
      %p34 = scmp.eq.s32.totalorder %s15, 0
      %p35 = por %p33, %p34
      %p36 = scmp.ne.s32.totalorder %s25, %s28
      %p37 = scmp.eq.s32.totalorder %s20, 1
      %p38 = por %p36, %p37
      %p39 = scmp.ne.s32.totalorder %s28, %s29
      %p40 = scmp.eq.s32.totalorder %s20, 0
      %p41 = por %p39, %p40
      %p42 = scmp.ne.s32.totalorder %s28, %s29
      %p43 = scmp.eq.s32.totalorder %s21, 1
      %p44 = por %p42, %p43
      %p46 = scmp.ne.s32.totalorder %s29, %s45
      %p47 = scmp.eq.s32.totalorder %s21, 0
      %p48 = por %p46, %p47
      %s50 = sadd.s32 %s49, 1
      %p53 = scmp.eq.s32.totalorder %s15, 1
      %p54 = scmp.ne.s32.totalorder %s49, %s51
      %p55 = scmp.eq.s32.totalorder %s15, 0
      %p56 = por %p54, %p55
      %p57 = scmp.ne.s32.totalorder %s49, %s51
      %p58 = scmp.eq.s32.totalorder %s20, 1
      %p59 = por %p57, %p58
      %p60 = scmp.ne.s32.totalorder %s51, %s52
      %p61 = scmp.eq.s32.totalorder %s20, 0
      %p62 = por %p60, %p61
      %p63 = scmp.ne.s32.totalorder %s51, %s52
      %p64 = scmp.eq.s32.totalorder %s21, 1
      %p65 = por %p63, %p64
      %p67 = scmp.ne.s32.totalorder %s52, %s66
      %p68 = scmp.eq.s32.totalorder %s21, 0
      %p69 = por %p67, %p68
      %s71 = sadd.s32 %s70, 1
      %p74 = scmp.eq.s32.totalorder %s15, 1
      %p75 = scmp.ne.s32.totalorder %s70, %s72
      %p76 = scmp.eq.s32.totalorder %s15, 0
      %p77 = por %p75, %p76
      %p78 = scmp.ne.s32.totalorder %s70, %s72
      %p79 = scmp.eq.s32.totalorder %s20, 1
      %p80 = por %p78, %p79
      %p81 = scmp.ne.s32.totalorder %s72, %s73
      %p82 = scmp.eq.s32.totalorder %s20, 0
      %p83 = por %p81, %p82
      %p84 = scmp.ne.s32.totalorder %s72, %s73
      %p85 = scmp.eq.s32.totalorder %s21, 1
      %p86 = por %p84, %p85
      %p88 = scmp.ne.s32.totalorder %s73, %s87
      %p89 = scmp.eq.s32.totalorder %s21, 0
      %p90 = por %p88, %p89
      %s92 = sadd.s32 %s91, 1
      %p95 = scmp.eq.s32.totalorder %s15, 1
      %p96 = scmp.ne.s32.totalorder %s91, %s93
      %p97 = scmp.eq.s32.totalorder %s15, 0
      %p98 = por %p96, %p97
      %p99 = scmp.ne.s32.totalorder %s91, %s93
      %p100 = scmp.eq.s32.totalorder %s20, 1
      %p101 = por %p99, %p100
      %p102 = scmp.ne.s32.totalorder %s93, %s94
      %p103 = scmp.eq.s32.totalorder %s20, 0
      %p104 = por %p102, %p103
      %p105 = scmp.ne.s32.totalorder %s93, %s94
      %p106 = scmp.eq.s32.totalorder %s21, 1
      %p107 = por %p105, %p106
      %p109 = scmp.ne.s32.totalorder %s94, %s108
      %p110 = scmp.eq.s32.totalorder %s21, 0
      %p111 = por %p109, %p110
      %s113 = sadd.s32 %s112, 1
      %p116 = scmp.eq.s32.totalorder %s15, 1
      %p117 = scmp.ne.s32.totalorder %s112, %s114
      %p118 = scmp.eq.s32.totalorder %s15, 0
      %p119 = por %p117, %p118
      %p120 = scmp.ne.s32.totalorder %s112, %s114
      %p121 = scmp.eq.s32.totalorder %s20, 1
      %p122 = por %p120, %p121
      %p123 = scmp.ne.s32.totalorder %s114, %s115
      %p124 = scmp.eq.s32.totalorder %s20, 0
      %p125 = por %p123, %p124
      %p126 = scmp.ne.s32.totalorder %s114, %s115
      %p127 = scmp.eq.s32.totalorder %s21, 1
      %p128 = por %p126, %p127
      %p130 = scmp.ne.s32.totalorder %s115, %s129
      %p131 = scmp.eq.s32.totalorder %s21, 0
      %p132 = por %p130, %p131
      %s134 = sadd.s32 %s133, 1
      %p137 = scmp.eq.s32.totalorder %s15, 1
      %p138 = scmp.ne.s32.totalorder %s133, %s135
      %p139 = scmp.eq.s32.totalorder %s15, 0
      %p140 = por %p138, %p139
      %p141 = scmp.ne.s32.totalorder %s133, %s135
      %p142 = scmp.eq.s32.totalorder %s20, 1
      %p143 = por %p141, %p142
      %p144 = scmp.ne.s32.totalorder %s135, %s136
      %p145 = scmp.eq.s32.totalorder %s20, 0
      %p146 = por %p144, %p145
      %p147 = scmp.ne.s32.totalorder %s135, %s136
      %p148 = scmp.eq.s32.totalorder %s21, 1
      %p149 = por %p147, %p148
      %p151 = scmp.ne.s32.totalorder %s136, %s150
      %p152 = scmp.eq.s32.totalorder %s21, 0
      %p153 = por %p151, %p152
      %s154 = ssub.s32 %s15, %s22
      %p155 = scmp.eq.s32.totalorder %s154, 0
      %s157 = sadd.s32 %s156, 1
      %s158 = scalar_select %p155, %s156, %s157
      %p161 = pneg %p155
      %p162 = scmp.eq.s32.totalorder %s15, 1
      %p163 = por %p161, %p162
      %p164 = scmp.ne.s32.totalorder %s156, %s159
      %p165 = scmp.eq.s32.totalorder %s15, 0
      %p166 = por %p164, %p165
      %p167 = scmp.ne.s32.totalorder %s156, %s159
      %p168 = scmp.eq.s32.totalorder %s20, 1
      %p169 = por %p167, %p168
      %p170 = scmp.ne.s32.totalorder %s159, %s160
      %p171 = scmp.eq.s32.totalorder %s20, 0
      %p172 = por %p170, %p171
      %p173 = scmp.ne.s32.totalorder %s159, %s160
      %p174 = scmp.eq.s32.totalorder %s21, 1
      %p175 = por %p173, %p174
      %p177 = scmp.ne.s32.totalorder %s160, %s176
      %p178 = scmp.eq.s32.totalorder %s21, 0
      %p179 = por %p177, %p178
      %p180 = scmp.le.s32.totalorder 1, %s15
      %p181 = scmp.lt.s32.totalorder %s15, 3
      %p182 = pnand %p180, %p181
      %p183 = pneg %p182
      // Predicated region
      $region9: #{tpu_custom_call.1} parent=5 // pred_check
        _
      $region10: #{tpu_custom_call.1} parent=5 // pred_check_branch
        %185 = sbr.rel (%p182) target = $region12
      $region11: #{tpu_custom_call.1} parent=5 // pred_region
        %s186 = ssub.s32 %s15, 1
        // Predicated region
        $region13: #{tpu_custom_call.1} parent=11 // pred_check
          %p187 = pneg %p62
        $region14: #{tpu_custom_call.1} parent=11 // pred_check_branch
          %189 = sbr.rel (%p187) target = $region16
        $region15: #{tpu_custom_call.1} parent=11 // pred_region
          _
        $region16: #{tpu_custom_call.1} parent=11 // pred_fallthru
          _
        // Predicated region
        $region17: #{tpu_custom_call.1} parent=11 // pred_check
          %p190 = pneg %p83
        $region18: #{tpu_custom_call.1} parent=11 // pred_check_branch
          %192 = sbr.rel (%p190) target = $region20
        $region19: #{tpu_custom_call.1} parent=11 // pred_region
          _
        $region20: #{tpu_custom_call.1} parent=11 // pred_fallthru
          _
        // Predicated region
        $region21: #{tpu_custom_call.1} parent=11 // pred_check
          %p193 = pneg %p104
        $region22: #{tpu_custom_call.1} parent=11 // pred_check_branch
          %195 = sbr.rel (%p193) target = $region24
        $region23: #{tpu_custom_call.1} parent=11 // pred_region
          _
        $region24: #{tpu_custom_call.1} parent=11 // pred_fallthru
          _
        // Predicated region
        $region25: #{tpu_custom_call.1} parent=11 // pred_check
          %p196 = pneg %p125
        $region26: #{tpu_custom_call.1} parent=11 // pred_check_branch
          %198 = sbr.rel (%p196) target = $region28
        $region27: #{tpu_custom_call.1} parent=11 // pred_region
          _
        $region28: #{tpu_custom_call.1} parent=11 // pred_fallthru
          _
        // Predicated region
        $region29: #{tpu_custom_call.1} parent=11 // pred_check
          %p199 = pneg %p146
        $region30: #{tpu_custom_call.1} parent=11 // pred_check_branch
          %201 = sbr.rel (%p199) target = $region32
        $region31: #{tpu_custom_call.1} parent=11 // pred_region
          _
        $region32: #{tpu_custom_call.1} parent=11 // pred_fallthru
          _
      $region12: #{tpu_custom_call.1} parent=5 // pred_fallthru
        _
      %p202 = scmp.lt.s32.totalorder %s15, 2
      // Predicated region
      $region33: #{tpu_custom_call.1} parent=5 // pred_check
        %p203 = pneg %p202
      $region34: #{tpu_custom_call.1} parent=5 // pred_check_branch
        %205 = sbr.rel (%p203) target = $region36
      $region35: #{tpu_custom_call.1} parent=5 // pred_region
        // Predicated region
        $region37: #{tpu_custom_call.1} parent=35 // pred_check
          %p206 = pneg %p35
        $region38: #{tpu_custom_call.1} parent=35 // pred_check_branch
          %208 = sbr.rel (%p206) target = $region40
        $region39: #{tpu_custom_call.1} parent=35 // pred_region
          %s209 = smul.u32 2, %s15
          %s210 = ssub.s32 3, %s209
          %p211 = scmp.lt.s32.totalorder %s210, 2
          %s212 = scalar_select %p211, %s210, 2
          %s213 = smul.u32 8, %s212
          %s214 = smul.u32 %s213, 16
          %p215 = scmp.lt.s32.totalorder %s209, 2
          %s216 = scalar_select %p215, %s209, 2
          %s217 = smul.addr %s216, 16
          %s218 = smul.addr %s217, 8
          %s219 = scalar_lea.vmem %s0, %s218
          %s220 = smul.u32 2, %s15
          %s221 = ssub.s32 3, %s220
          %p222 = scmp.lt.s32.totalorder %s221, 2
          %s223 = scalar_select %p222, %s221, 2
          %s224 = smul.u32 8, %s223
          %s225 = smul.u32 %s224, 16
        $region40: #{tpu_custom_call.1} parent=35 // pred_fallthru
          _
      $region36: #{tpu_custom_call.1} parent=5 // pred_fallthru
        _
      %p226 = scmp.le.s32.totalorder 1, %s15
      %p227 = scmp.lt.s32.totalorder %s15, 3
      %p228 = pnand %p226, %p227
      %p229 = pneg %p228
      // Predicated region
      $region41: #{tpu_custom_call.1} parent=5 // pred_check
        _
      $region42: #{tpu_custom_call.1} parent=5 // pred_check_branch
        %231 = sbr.rel (%p228) target = $region44
      $region43: #{tpu_custom_call.1} parent=5 // pred_region
        %s232 = ssub.s32 %s15, 1
        %s233 = smul.u32 2, %s20
        %s234 = ssub.s32 3, %s233
        %p235 = scmp.lt.s32.totalorder %s234, 2
        %s236 = scalar_select %p235, %s234, 2
        %s237 = smul.u32 8, %s236
        %s238 = smul.u32 %s237, 16
        %p239 = scmp.lt.s32.totalorder %s233, 2
        %s240 = scalar_select %p239, %s233, 2
        %s241 = smul.addr %s240, 16
        %s242 = smul.addr %s241, 8
        %s243 = scalar_lea.vmem %s0, %s242
        %p244 = pneg %p41
        %p245 = pneg %p38
        %p246 = pneg %p62
        %p247 = pneg %p59
        %p248 = pneg %p83
        %p249 = pneg %p80
        %p250 = pneg %p104
        %p251 = pneg %p101
        %p252 = pneg %p125
        %p253 = pneg %p122
        %p254 = pneg %p146
        %p255 = pneg %p143
        %p256 = pneg %p172
        %p257 = pneg %p169
        %s258 = sand.u32 %s159, 1
        %s259 = scalar_lea.sflag [#allocation3], %s258
        %s260 = sand.u32 %s159, 1
        %s261 = smul.addr %s260, 256
        %s262 = scalar_lea.vmem [#allocation2], %s261
        %s263 = smul.u32 2, %s20
        %s264 = ssub.s32 3, %s263
        %p265 = scmp.lt.s32.totalorder %s264, 2
        %s266 = scalar_select %p265, %s264, 2
        %s267 = smul.u32 8, %s266
        %s268 = smul.u32 %s267, 16
        %p269 = scmp.lt.s32.totalorder %s263, 2
        %s270 = scalar_select %p269, %s263, 2
        %s271 = smul.addr %s270, 16
        %s272 = smul.addr %s271, 8
        %s273 = scalar_lea.vmem %s0, %s272
        %s274 = smul.u32 2, %s20
        %s275 = ssub.s32 3, %s274
        %p276 = scmp.lt.s32.totalorder %s275, 2
        %s277 = scalar_select %p276, %s275, 2
        %s278 = smul.u32 8, %s277
        %s279 = smul.u32 %s278, 16
        %s280 = smul.u32 2, %s20
        %s281 = ssub.s32 3, %s280
        %p282 = scmp.lt.s32.totalorder %s281, 2
        %s283 = scalar_select %p282, %s281, 2
        %s284 = smul.u32 8, %s283
        %s285 = smul.u32 %s284, 16
        %v286 = vld [vmem:[%s273] sm:$0xff]
        %v287 = vld [vmem:[%s273 + $0x8] sm:$0xff]
        %v288 = vld [vmem:[%s273 + $0x10] sm:$0xff]
        %v289 = vld [vmem:[%s273 + $0x18] sm:$0xff]
        %v290 = vld [vmem:[%s273 + $0x20] sm:$0xff]
        %v291 = vld [vmem:[%s273 + $0x28] sm:$0xff]
        %v292 = vld [vmem:[%s273 + $0x30] sm:$0xff]
        %v293 = vld [vmem:[%s273 + $0x38] sm:$0xff]
        %v294 = vld [vmem:[%s273 + $0x40] sm:$0xff]
        %v295 = vld [vmem:[%s273 + $0x48] sm:$0xff]
        %v296 = vld [vmem:[%s273 + $0x50] sm:$0xff]
        %v297 = vld [vmem:[%s273 + $0x58] sm:$0xff]
        %v298 = vld [vmem:[%s273 + $0x60] sm:$0xff]
        %v299 = vld [vmem:[%s273 + $0x68] sm:$0xff]
        %v300 = vld [vmem:[%s273 + $0x70] sm:$0xff]
        %v301 = vld [vmem:[%s273 + $0x78] sm:$0xff]
        %v302 = vld [vmem:[%s273 + $0x80] sm:$0xff]
        %v303 = vld [vmem:[%s273 + $0x88] sm:$0xff]
        %v304 = vld [vmem:[%s273 + $0x90] sm:$0xff]
        %v305 = vld [vmem:[%s273 + $0x98] sm:$0xff]
        %v306 = vld [vmem:[%s273 + $0xa0] sm:$0xff]
        %v307 = vld [vmem:[%s273 + $0xa8] sm:$0xff]
        %v308 = vld [vmem:[%s273 + $0xb0] sm:$0xff]
        %v309 = vld [vmem:[%s273 + $0xb8] sm:$0xff]
        %v310 = vld [vmem:[%s273 + $0xc0] sm:$0xff]
        %v311 = vld [vmem:[%s273 + $0xc8] sm:$0xff]
        %v312 = vld [vmem:[%s273 + $0xd0] sm:$0xff]
        %v313 = vld [vmem:[%s273 + $0xd8] sm:$0xff]
        %v314 = vld [vmem:[%s273 + $0xe0] sm:$0xff]
        %v315 = vld [vmem:[%s273 + $0xe8] sm:$0xff]
        %v316 = vld [vmem:[%s273 + $0xf0] sm:$0xff]
        %v317 = vld [vmem:[%s273 + $0xf8] sm:$0xff]
        %v318 = vld [vmem:[%s1] sm:$0xff]
        %v319 = vld [vmem:[%s1 + $0x8] sm:$0xff]
        %v320 = vld [vmem:[%s1 + $0x10] sm:$0xff]
        %v321 = vld [vmem:[%s1 + $0x18] sm:$0xff]
        %v322 = vld [vmem:[%s1 + $0x20] sm:$0xff]
        %v323 = vld [vmem:[%s1 + $0x28] sm:$0xff]
        %v324 = vld [vmem:[%s1 + $0x30] sm:$0xff]
        %v325 = vld [vmem:[%s1 + $0x38] sm:$0xff]
        %v326 = vld [vmem:[%s1 + $0x40] sm:$0xff]
        %v327 = vld [vmem:[%s1 + $0x48] sm:$0xff]
        %v328 = vld [vmem:[%s1 + $0x50] sm:$0xff]
        %v329 = vld [vmem:[%s1 + $0x58] sm:$0xff]
        %v330 = vld [vmem:[%s1 + $0x60] sm:$0xff]
        %v331 = vld [vmem:[%s1 + $0x68] sm:$0xff]
        %v332 = vld [vmem:[%s1 + $0x70] sm:$0xff]
        %v333 = vld [vmem:[%s1 + $0x78] sm:$0xff]
        %v334 = vld [vmem:[%s1 + $0x80] sm:$0xff]
        %v335 = vld [vmem:[%s1 + $0x88] sm:$0xff]
        %v336 = vld [vmem:[%s1 + $0x90] sm:$0xff]
        %v337 = vld [vmem:[%s1 + $0x98] sm:$0xff]
        %v338 = vld [vmem:[%s1 + $0xa0] sm:$0xff]
        %v339 = vld [vmem:[%s1 + $0xa8] sm:$0xff]
        %v340 = vld [vmem:[%s1 + $0xb0] sm:$0xff]
        %v341 = vld [vmem:[%s1 + $0xb8] sm:$0xff]
        %v342 = vld [vmem:[%s1 + $0xc0] sm:$0xff]
        %v343 = vld [vmem:[%s1 + $0xc8] sm:$0xff]
        %v344 = vld [vmem:[%s1 + $0xd0] sm:$0xff]
        %v345 = vld [vmem:[%s1 + $0xd8] sm:$0xff]
        %v346 = vld [vmem:[%s1 + $0xe0] sm:$0xff]
        %v347 = vld [vmem:[%s1 + $0xe8] sm:$0xff]
        %v348 = vld [vmem:[%s1 + $0xf0] sm:$0xff]
        %v349 = vld [vmem:[%s1 + $0xf8] sm:$0xff]
        %v350 = vld [vmem:[%s1 + $0x100] sm:$0xff]
        %v351 = vld [vmem:[%s1 + $0x108] sm:$0xff]
        %v352 = vld [vmem:[%s1 + $0x110] sm:$0xff]
        %v353 = vld [vmem:[%s1 + $0x118] sm:$0xff]
        %v354 = vld [vmem:[%s1 + $0x120] sm:$0xff]
        %v355 = vld [vmem:[%s1 + $0x128] sm:$0xff]
        %v356 = vld [vmem:[%s1 + $0x130] sm:$0xff]
        %v357 = vld [vmem:[%s1 + $0x138] sm:$0xff]
        %v358 = vld [vmem:[%s1 + $0x140] sm:$0xff]
        %v359 = vld [vmem:[%s1 + $0x148] sm:$0xff]
        %v360 = vld [vmem:[%s1 + $0x150] sm:$0xff]
        %v361 = vld [vmem:[%s1 + $0x158] sm:$0xff]
        %v362 = vld [vmem:[%s1 + $0x160] sm:$0xff]
        %v363 = vld [vmem:[%s1 + $0x168] sm:$0xff]
        %v364 = vld [vmem:[%s1 + $0x170] sm:$0xff]
        %v365 = vld [vmem:[%s1 + $0x178] sm:$0xff]
        %v366 = vld [vmem:[%s1 + $0x180] sm:$0xff]
        %v367 = vld [vmem:[%s1 + $0x188] sm:$0xff]
        %v368 = vld [vmem:[%s1 + $0x190] sm:$0xff]
        %v369 = vld [vmem:[%s1 + $0x198] sm:$0xff]
        %v370 = vld [vmem:[%s1 + $0x1a0] sm:$0xff]
        %v371 = vld [vmem:[%s1 + $0x1a8] sm:$0xff]
        %v372 = vld [vmem:[%s1 + $0x1b0] sm:$0xff]
        %v373 = vld [vmem:[%s1 + $0x1b8] sm:$0xff]
        %v374 = vld [vmem:[%s1 + $0x1c0] sm:$0xff]
        %v375 = vld [vmem:[%s1 + $0x1c8] sm:$0xff]
        %v376 = vld [vmem:[%s1 + $0x1d0] sm:$0xff]
        %v377 = vld [vmem:[%s1 + $0x1d8] sm:$0xff]
        %v378 = vld [vmem:[%s1 + $0x1e0] sm:$0xff]
        %v379 = vld [vmem:[%s1 + $0x1e8] sm:$0xff]
        %v380 = vld [vmem:[%s1 + $0x1f0] sm:$0xff]
        %v381 = vld [vmem:[%s1 + $0x1f8] sm:$0xff]
        %v382 = vld [vmem:[%s1 + $0x200] sm:$0xff]
        %v383 = vld [vmem:[%s1 + $0x208] sm:$0xff]
        %v384 = vld [vmem:[%s1 + $0x210] sm:$0xff]
        %v385 = vld [vmem:[%s1 + $0x218] sm:$0xff]
        %v386 = vld [vmem:[%s1 + $0x220] sm:$0xff]
        %v387 = vld [vmem:[%s1 + $0x228] sm:$0xff]
        %v388 = vld [vmem:[%s1 + $0x230] sm:$0xff]
        %v389 = vld [vmem:[%s1 + $0x238] sm:$0xff]
        %v390 = vld [vmem:[%s1 + $0x240] sm:$0xff]
        %v391 = vld [vmem:[%s1 + $0x248] sm:$0xff]
        %v392 = vld [vmem:[%s1 + $0x250] sm:$0xff]
        %v393 = vld [vmem:[%s1 + $0x258] sm:$0xff]
        %v394 = vld [vmem:[%s1 + $0x260] sm:$0xff]
        %v395 = vld [vmem:[%s1 + $0x268] sm:$0xff]
        %v396 = vld [vmem:[%s1 + $0x270] sm:$0xff]
        %v397 = vld [vmem:[%s1 + $0x278] sm:$0xff]
        %v398 = vld [vmem:[%s1 + $0x280] sm:$0xff]
        %v399 = vld [vmem:[%s1 + $0x288] sm:$0xff]
        %v400 = vld [vmem:[%s1 + $0x290] sm:$0xff]
        %v401 = vld [vmem:[%s1 + $0x298] sm:$0xff]
        %v402 = vld [vmem:[%s1 + $0x2a0] sm:$0xff]
        %v403 = vld [vmem:[%s1 + $0x2a8] sm:$0xff]
        %v404 = vld [vmem:[%s1 + $0x2b0] sm:$0xff]
        %v405 = vld [vmem:[%s1 + $0x2b8] sm:$0xff]
        %v406 = vld [vmem:[%s1 + $0x2c0] sm:$0xff]
        %v407 = vld [vmem:[%s1 + $0x2c8] sm:$0xff]
        %v408 = vld [vmem:[%s1 + $0x2d0] sm:$0xff]
        %v409 = vld [vmem:[%s1 + $0x2d8] sm:$0xff]
        %v410 = vld [vmem:[%s1 + $0x2e0] sm:$0xff]
        %v411 = vld [vmem:[%s1 + $0x2e8] sm:$0xff]
        %v412 = vld [vmem:[%s1 + $0x2f0] sm:$0xff]
        %v413 = vld [vmem:[%s1 + $0x2f8] sm:$0xff]
        %v414 = vld [vmem:[%s1 + $0x300] sm:$0xff]
        %v415 = vld [vmem:[%s1 + $0x308] sm:$0xff]
        %v416 = vld [vmem:[%s1 + $0x310] sm:$0xff]
        %v417 = vld [vmem:[%s1 + $0x318] sm:$0xff]
        %v418 = vld [vmem:[%s1 + $0x320] sm:$0xff]
        %v419 = vld [vmem:[%s1 + $0x328] sm:$0xff]
        %v420 = vld [vmem:[%s1 + $0x330] sm:$0xff]
        %v421 = vld [vmem:[%s1 + $0x338] sm:$0xff]
        %v422 = vld [vmem:[%s1 + $0x340] sm:$0xff]
        %v423 = vld [vmem:[%s1 + $0x348] sm:$0xff]
        %v424 = vld [vmem:[%s1 + $0x350] sm:$0xff]
        %v425 = vld [vmem:[%s1 + $0x358] sm:$0xff]
        %v426 = vld [vmem:[%s1 + $0x360] sm:$0xff]
        %v427 = vld [vmem:[%s1 + $0x368] sm:$0xff]
        %v428 = vld [vmem:[%s1 + $0x370] sm:$0xff]
        %v429 = vld [vmem:[%s1 + $0x378] sm:$0xff]
        %v430 = vld [vmem:[%s1 + $0x380] sm:$0xff]
        %v431 = vld [vmem:[%s1 + $0x388] sm:$0xff]
        %v432 = vld [vmem:[%s1 + $0x390] sm:$0xff]
        %v433 = vld [vmem:[%s1 + $0x398] sm:$0xff]
        %v434 = vld [vmem:[%s1 + $0x3a0] sm:$0xff]
        %v435 = vld [vmem:[%s1 + $0x3a8] sm:$0xff]
        %v436 = vld [vmem:[%s1 + $0x3b0] sm:$0xff]
        %v437 = vld [vmem:[%s1 + $0x3b8] sm:$0xff]
        %v438 = vld [vmem:[%s1 + $0x3c0] sm:$0xff]
        %v439 = vld [vmem:[%s1 + $0x3c8] sm:$0xff]
        %v440 = vld [vmem:[%s1 + $0x3d0] sm:$0xff]
        %v441 = vld [vmem:[%s1 + $0x3d8] sm:$0xff]
        %v442 = vld [vmem:[%s1 + $0x3e0] sm:$0xff]
        %v443 = vld [vmem:[%s1 + $0x3e8] sm:$0xff]
        %v444 = vld [vmem:[%s1 + $0x3f0] sm:$0xff]
        %v445 = vld [vmem:[%s1 + $0x3f8] sm:$0xff]
        %v446 = vld [vmem:[%s1 + $0x400] sm:$0xff]
        %v447 = vld [vmem:[%s1 + $0x408] sm:$0xff]
        %v448 = vld [vmem:[%s1 + $0x410] sm:$0xff]
        %v449 = vld [vmem:[%s1 + $0x418] sm:$0xff]
        %v450 = vld [vmem:[%s1 + $0x420] sm:$0xff]
        %v451 = vld [vmem:[%s1 + $0x428] sm:$0xff]
        %v452 = vld [vmem:[%s1 + $0x430] sm:$0xff]
        %v453 = vld [vmem:[%s1 + $0x438] sm:$0xff]
        %v454 = vld [vmem:[%s1 + $0x440] sm:$0xff]
        %v455 = vld [vmem:[%s1 + $0x448] sm:$0xff]
        %v456 = vld [vmem:[%s1 + $0x450] sm:$0xff]
        %v457 = vld [vmem:[%s1 + $0x458] sm:$0xff]
        %v458 = vld [vmem:[%s1 + $0x460] sm:$0xff]
        %v459 = vld [vmem:[%s1 + $0x468] sm:$0xff]
        %v460 = vld [vmem:[%s1 + $0x470] sm:$0xff]
        %v461 = vld [vmem:[%s1 + $0x478] sm:$0xff]
        %v462 = vld [vmem:[%s1 + $0x480] sm:$0xff]
        %v463 = vld [vmem:[%s1 + $0x488] sm:$0xff]
        %v464 = vld [vmem:[%s1 + $0x490] sm:$0xff]
        %v465 = vld [vmem:[%s1 + $0x498] sm:$0xff]
        %v466 = vld [vmem:[%s1 + $0x4a0] sm:$0xff]
        %v467 = vld [vmem:[%s1 + $0x4a8] sm:$0xff]
        %v468 = vld [vmem:[%s1 + $0x4b0] sm:$0xff]
        %v469 = vld [vmem:[%s1 + $0x4b8] sm:$0xff]
        %v470 = vld [vmem:[%s1 + $0x4c0] sm:$0xff]
        %v471 = vld [vmem:[%s1 + $0x4c8] sm:$0xff]
        %v472 = vld [vmem:[%s1 + $0x4d0] sm:$0xff]
        %v473 = vld [vmem:[%s1 + $0x4d8] sm:$0xff]
        %v474 = vld [vmem:[%s1 + $0x4e0] sm:$0xff]
        %v475 = vld [vmem:[%s1 + $0x4e8] sm:$0xff]
        %v476 = vld [vmem:[%s1 + $0x4f0] sm:$0xff]
        %v477 = vld [vmem:[%s1 + $0x4f8] sm:$0xff]
        %v478 = vld [vmem:[%s1 + $0x500] sm:$0xff]
        %v479 = vld [vmem:[%s1 + $0x508] sm:$0xff]
        %v480 = vld [vmem:[%s1 + $0x510] sm:$0xff]
        %v481 = vld [vmem:[%s1 + $0x518] sm:$0xff]
        %v482 = vld [vmem:[%s1 + $0x520] sm:$0xff]
        %v483 = vld [vmem:[%s1 + $0x528] sm:$0xff]
        %v484 = vld [vmem:[%s1 + $0x530] sm:$0xff]
        %v485 = vld [vmem:[%s1 + $0x538] sm:$0xff]
        %v486 = vld [vmem:[%s1 + $0x540] sm:$0xff]
        %v487 = vld [vmem:[%s1 + $0x548] sm:$0xff]
        %v488 = vld [vmem:[%s1 + $0x550] sm:$0xff]
        %v489 = vld [vmem:[%s1 + $0x558] sm:$0xff]
        %v490 = vld [vmem:[%s1 + $0x560] sm:$0xff]
        %v491 = vld [vmem:[%s1 + $0x568] sm:$0xff]
        %v492 = vld [vmem:[%s1 + $0x570] sm:$0xff]
        %v493 = vld [vmem:[%s1 + $0x578] sm:$0xff]
        %v494 = vld [vmem:[%s1 + $0x580] sm:$0xff]
        %v495 = vld [vmem:[%s1 + $0x588] sm:$0xff]
        %v496 = vld [vmem:[%s1 + $0x590] sm:$0xff]
        %v497 = vld [vmem:[%s1 + $0x598] sm:$0xff]
        %v498 = vld [vmem:[%s1 + $0x5a0] sm:$0xff]
        %v499 = vld [vmem:[%s1 + $0x5a8] sm:$0xff]
        %v500 = vld [vmem:[%s1 + $0x5b0] sm:$0xff]
        %v501 = vld [vmem:[%s1 + $0x5b8] sm:$0xff]
        %v502 = vld [vmem:[%s1 + $0x5c0] sm:$0xff]
        %v503 = vld [vmem:[%s1 + $0x5c8] sm:$0xff]
        %v504 = vld [vmem:[%s1 + $0x5d0] sm:$0xff]
        %v505 = vld [vmem:[%s1 + $0x5d8] sm:$0xff]
        %v506 = vld [vmem:[%s1 + $0x5e0] sm:$0xff]
        %v507 = vld [vmem:[%s1 + $0x5e8] sm:$0xff]
        %v508 = vld [vmem:[%s1 + $0x5f0] sm:$0xff]
        %v509 = vld [vmem:[%s1 + $0x5f8] sm:$0xff]
        %v510 = vld [vmem:[%s1 + $0x600] sm:$0xff]
        %v511 = vld [vmem:[%s1 + $0x608] sm:$0xff]
        %v512 = vld [vmem:[%s1 + $0x610] sm:$0xff]
        %v513 = vld [vmem:[%s1 + $0x618] sm:$0xff]
        %v514 = vld [vmem:[%s1 + $0x620] sm:$0xff]
        %v515 = vld [vmem:[%s1 + $0x628] sm:$0xff]
        %v516 = vld [vmem:[%s1 + $0x630] sm:$0xff]
        %v517 = vld [vmem:[%s1 + $0x638] sm:$0xff]
        %v518 = vld [vmem:[%s1 + $0x640] sm:$0xff]
        %v519 = vld [vmem:[%s1 + $0x648] sm:$0xff]
        %v520 = vld [vmem:[%s1 + $0x650] sm:$0xff]
        %v521 = vld [vmem:[%s1 + $0x658] sm:$0xff]
        %v522 = vld [vmem:[%s1 + $0x660] sm:$0xff]
        %v523 = vld [vmem:[%s1 + $0x668] sm:$0xff]
        %v524 = vld [vmem:[%s1 + $0x670] sm:$0xff]
        %v525 = vld [vmem:[%s1 + $0x678] sm:$0xff]
        %v526 = vld [vmem:[%s1 + $0x680] sm:$0xff]
        %v527 = vld [vmem:[%s1 + $0x688] sm:$0xff]
        %v528 = vld [vmem:[%s1 + $0x690] sm:$0xff]
        %v529 = vld [vmem:[%s1 + $0x698] sm:$0xff]
        %v530 = vld [vmem:[%s1 + $0x6a0] sm:$0xff]
        %v531 = vld [vmem:[%s1 + $0x6a8] sm:$0xff]
        %v532 = vld [vmem:[%s1 + $0x6b0] sm:$0xff]
        %v533 = vld [vmem:[%s1 + $0x6b8] sm:$0xff]
        %v534 = vld [vmem:[%s1 + $0x6c0] sm:$0xff]
        %v535 = vld [vmem:[%s1 + $0x6c8] sm:$0xff]
        %v536 = vld [vmem:[%s1 + $0x6d0] sm:$0xff]
        %v537 = vld [vmem:[%s1 + $0x6d8] sm:$0xff]
        %v538 = vld [vmem:[%s1 + $0x6e0] sm:$0xff]
        %v539 = vld [vmem:[%s1 + $0x6e8] sm:$0xff]
        %v540 = vld [vmem:[%s1 + $0x6f0] sm:$0xff]
        %v541 = vld [vmem:[%s1 + $0x6f8] sm:$0xff]
        %v542 = vld [vmem:[%s1 + $0x700] sm:$0xff]
        %v543 = vld [vmem:[%s1 + $0x708] sm:$0xff]
        %v544 = vld [vmem:[%s1 + $0x710] sm:$0xff]
        %v545 = vld [vmem:[%s1 + $0x718] sm:$0xff]
        %v546 = vld [vmem:[%s1 + $0x720] sm:$0xff]
        %v547 = vld [vmem:[%s1 + $0x728] sm:$0xff]
        %v548 = vld [vmem:[%s1 + $0x730] sm:$0xff]
        %v549 = vld [vmem:[%s1 + $0x738] sm:$0xff]
        %v550 = vld [vmem:[%s1 + $0x740] sm:$0xff]
        %v551 = vld [vmem:[%s1 + $0x748] sm:$0xff]
        %v552 = vld [vmem:[%s1 + $0x750] sm:$0xff]
        %v553 = vld [vmem:[%s1 + $0x758] sm:$0xff]
        %v554 = vld [vmem:[%s1 + $0x760] sm:$0xff]
        %v555 = vld [vmem:[%s1 + $0x768] sm:$0xff]
        %v556 = vld [vmem:[%s1 + $0x770] sm:$0xff]
        %v557 = vld [vmem:[%s1 + $0x778] sm:$0xff]
        %v558 = vld [vmem:[%s1 + $0x780] sm:$0xff]
        %v559 = vld [vmem:[%s1 + $0x788] sm:$0xff]
        %v560 = vld [vmem:[%s1 + $0x790] sm:$0xff]
        %v561 = vld [vmem:[%s1 + $0x798] sm:$0xff]
        %v562 = vld [vmem:[%s1 + $0x7a0] sm:$0xff]
        %v563 = vld [vmem:[%s1 + $0x7a8] sm:$0xff]
        %v564 = vld [vmem:[%s1 + $0x7b0] sm:$0xff]
        %v565 = vld [vmem:[%s1 + $0x7b8] sm:$0xff]
        %v566 = vld [vmem:[%s1 + $0x7c0] sm:$0xff]
        %v567 = vld [vmem:[%s1 + $0x7c8] sm:$0xff]
        %v568 = vld [vmem:[%s1 + $0x7d0] sm:$0xff]
        %v569 = vld [vmem:[%s1 + $0x7d8] sm:$0xff]
        %v570 = vld [vmem:[%s1 + $0x7e0] sm:$0xff]
        %v571 = vld [vmem:[%s1 + $0x7e8] sm:$0xff]
        %v572 = vld [vmem:[%s1 + $0x7f0] sm:$0xff]
        %v573 = vld [vmem:[%s1 + $0x7f8] sm:$0xff]
        %v574 = vld [vmem:[%s2] sm:$0x1]
        %v576 = vperm.slane %v574, 0
        %578 = vmatpush.msra.mxu0 %v333
        %579 = vmatpush.msra.mxu0 %v332
        %580 = vmatpush.msra.mxu0 %v331
        %581 = vmatpush.msra.mxu0 %v330
        %582 = vmatpush.msra.mxu0 %v329
        %583 = vmatpush.msra.mxu0 %v328
        %584 = vmatpush.msra.mxu0 %v327
        %585 = vmatpush.msra.mxu0 %v326
        %586 = vmatpush.msra.mxu0 %v325
        %587 = vmatpush.msra.mxu0 %v324
        %588 = vmatpush.msra.mxu0 %v323
        %589 = vmatpush.msra.mxu0 %v322
        %590 = vmatpush.msra.mxu0 %v321
        %591 = vmatpush.msra.mxu0 %v320
        %592 = vmatpush.msra.mxu0 %v319
        %593 = vmatpush.msra.mxu0 %v318
        %594 = vmatmul.f32.gmra.mxu0 %v286
        %v595 = vpop.f32.mrf.mxu0
        %v596 = vadd.f32 %v576, %v595
        %597 = vmatmul.f32.gmra.mxu0 %v302
        %v598 = vpop.f32.mrf.mxu0
        %v599 = vadd.f32 %v576, %v598
        %600 = vdwg.mxu0
        %601 = vmatpush.msra.mxu0 %v349
        %602 = vmatpush.msra.mxu0 %v348
        %603 = vmatpush.msra.mxu0 %v347
        %604 = vmatpush.msra.mxu0 %v346
        %605 = vmatpush.msra.mxu0 %v345
        %606 = vmatpush.msra.mxu0 %v344
        %607 = vmatpush.msra.mxu0 %v343
        %608 = vmatpush.msra.mxu0 %v342
        %609 = vmatpush.msra.mxu0 %v341
        %610 = vmatpush.msra.mxu0 %v340
        %611 = vmatpush.msra.mxu0 %v339
        %612 = vmatpush.msra.mxu0 %v338
        %613 = vmatpush.msra.mxu0 %v337
        %614 = vmatpush.msra.mxu0 %v336
        %615 = vmatpush.msra.mxu0 %v335
        %616 = vmatpush.msra.mxu0 %v334
        %617 = vmatmul.f32.gmra.mxu0 %v287
        %v618 = vpop.f32.mrf.mxu0
        %v619 = vadd.f32 %v596, %v618
        %620 = vmatmul.f32.gmra.mxu0 %v303
        %v621 = vpop.f32.mrf.mxu0
        %v622 = vadd.f32 %v599, %v621
        %623 = vdwg.mxu0
        %624 = vmatpush.msra.mxu0 %v365
        %625 = vmatpush.msra.mxu0 %v364
        %626 = vmatpush.msra.mxu0 %v363
        %627 = vmatpush.msra.mxu0 %v362
        %628 = vmatpush.msra.mxu0 %v361
        %629 = vmatpush.msra.mxu0 %v360
        %630 = vmatpush.msra.mxu0 %v359
        %631 = vmatpush.msra.mxu0 %v358
        %632 = vmatpush.msra.mxu0 %v357
        %633 = vmatpush.msra.mxu0 %v356
        %634 = vmatpush.msra.mxu0 %v355
        %635 = vmatpush.msra.mxu0 %v354
        %636 = vmatpush.msra.mxu0 %v353
        %637 = vmatpush.msra.mxu0 %v352
        %638 = vmatpush.msra.mxu0 %v351
        %639 = vmatpush.msra.mxu0 %v350
        %640 = vmatmul.f32.gmra.mxu0 %v288
        %v641 = vpop.f32.mrf.mxu0
        %v642 = vadd.f32 %v619, %v641
        %643 = vmatmul.f32.gmra.mxu0 %v304
        %v644 = vpop.f32.mrf.mxu0
        %v645 = vadd.f32 %v622, %v644
        %646 = vdwg.mxu0
        %647 = vmatpush.msra.mxu0 %v381
        %648 = vmatpush.msra.mxu0 %v380
        %649 = vmatpush.msra.mxu0 %v379
        %650 = vmatpush.msra.mxu0 %v378
        %651 = vmatpush.msra.mxu0 %v377
        %652 = vmatpush.msra.mxu0 %v376
        %653 = vmatpush.msra.mxu0 %v375
        %654 = vmatpush.msra.mxu0 %v374
        %655 = vmatpush.msra.mxu0 %v373
        %656 = vmatpush.msra.mxu0 %v372
        %657 = vmatpush.msra.mxu0 %v371
        %658 = vmatpush.msra.mxu0 %v370
        %659 = vmatpush.msra.mxu0 %v369
        %660 = vmatpush.msra.mxu0 %v368
        %661 = vmatpush.msra.mxu0 %v367
        %662 = vmatpush.msra.mxu0 %v366
        %663 = vmatmul.f32.gmra.mxu0 %v289
        %v664 = vpop.f32.mrf.mxu0
        %v665 = vadd.f32 %v642, %v664
        %666 = vmatmul.f32.gmra.mxu0 %v305
        %v667 = vpop.f32.mrf.mxu0
        %v668 = vadd.f32 %v645, %v667
        %669 = vdwg.mxu0
        %670 = vmatpush.msra.mxu0 %v397
        %671 = vmatpush.msra.mxu0 %v396
        %672 = vmatpush.msra.mxu0 %v395
        %673 = vmatpush.msra.mxu0 %v394
        %674 = vmatpush.msra.mxu0 %v393
        %675 = vmatpush.msra.mxu0 %v392
        %676 = vmatpush.msra.mxu0 %v391
        %677 = vmatpush.msra.mxu0 %v390
        %678 = vmatpush.msra.mxu0 %v389
        %679 = vmatpush.msra.mxu0 %v388
        %680 = vmatpush.msra.mxu0 %v387
        %681 = vmatpush.msra.mxu0 %v386
        %682 = vmatpush.msra.mxu0 %v385
        %683 = vmatpush.msra.mxu0 %v384
        %684 = vmatpush.msra.mxu0 %v383
        %685 = vmatpush.msra.mxu0 %v382
        %686 = vmatmul.f32.gmra.mxu0 %v290
        %v687 = vpop.f32.mrf.mxu0
        %v688 = vadd.f32 %v665, %v687
        %689 = vmatmul.f32.gmra.mxu0 %v306
        %v690 = vpop.f32.mrf.mxu0
        %v691 = vadd.f32 %v668, %v690
        %692 = vdwg.mxu0
        %693 = vmatpush.msra.mxu0 %v413
        %694 = vmatpush.msra.mxu0 %v412
        %695 = vmatpush.msra.mxu0 %v411
        %696 = vmatpush.msra.mxu0 %v410
        %697 = vmatpush.msra.mxu0 %v409
        %698 = vmatpush.msra.mxu0 %v408
        %699 = vmatpush.msra.mxu0 %v407
        %700 = vmatpush.msra.mxu0 %v406
        %701 = vmatpush.msra.mxu0 %v405
        %702 = vmatpush.msra.mxu0 %v404
        %703 = vmatpush.msra.mxu0 %v403
        %704 = vmatpush.msra.mxu0 %v402
        %705 = vmatpush.msra.mxu0 %v401
        %706 = vmatpush.msra.mxu0 %v400
        %707 = vmatpush.msra.mxu0 %v399
        %708 = vmatpush.msra.mxu0 %v398
        %709 = vmatmul.f32.gmra.mxu0 %v291
        %v710 = vpop.f32.mrf.mxu0
        %v711 = vadd.f32 %v688, %v710
        %712 = vmatmul.f32.gmra.mxu0 %v307
        %v713 = vpop.f32.mrf.mxu0
        %v714 = vadd.f32 %v691, %v713
        %715 = vdwg.mxu0
        %716 = vmatpush.msra.mxu0 %v429
        %717 = vmatpush.msra.mxu0 %v428
        %718 = vmatpush.msra.mxu0 %v427
        %719 = vmatpush.msra.mxu0 %v426
        %720 = vmatpush.msra.mxu0 %v425
        %721 = vmatpush.msra.mxu0 %v424
        %722 = vmatpush.msra.mxu0 %v423
        %723 = vmatpush.msra.mxu0 %v422
        %724 = vmatpush.msra.mxu0 %v421
        %725 = vmatpush.msra.mxu0 %v420
        %726 = vmatpush.msra.mxu0 %v419
        %727 = vmatpush.msra.mxu0 %v418
        %728 = vmatpush.msra.mxu0 %v417
        %729 = vmatpush.msra.mxu0 %v416
        %730 = vmatpush.msra.mxu0 %v415
        %731 = vmatpush.msra.mxu0 %v414
        %732 = vmatmul.f32.gmra.mxu0 %v292
        %v733 = vpop.f32.mrf.mxu0
        %v734 = vadd.f32 %v711, %v733
        %735 = vmatmul.f32.gmra.mxu0 %v308
        %v736 = vpop.f32.mrf.mxu0
        %v737 = vadd.f32 %v714, %v736
        %738 = vdwg.mxu0
        %739 = vmatpush.msra.mxu0 %v445
        %740 = vmatpush.msra.mxu0 %v444
        %741 = vmatpush.msra.mxu0 %v443
        %742 = vmatpush.msra.mxu0 %v442
        %743 = vmatpush.msra.mxu0 %v441
        %744 = vmatpush.msra.mxu0 %v440
        %745 = vmatpush.msra.mxu0 %v439
        %746 = vmatpush.msra.mxu0 %v438
        %747 = vmatpush.msra.mxu0 %v437
        %748 = vmatpush.msra.mxu0 %v436
        %749 = vmatpush.msra.mxu0 %v435
        %750 = vmatpush.msra.mxu0 %v434
        %751 = vmatpush.msra.mxu0 %v433
        %752 = vmatpush.msra.mxu0 %v432
        %753 = vmatpush.msra.mxu0 %v431
        %754 = vmatpush.msra.mxu0 %v430
        %755 = vmatmul.f32.gmra.mxu0 %v293
        %v756 = vpop.f32.mrf.mxu0
        %v757 = vadd.f32 %v734, %v756
        %758 = vmatmul.f32.gmra.mxu0 %v309
        %v759 = vpop.f32.mrf.mxu0
        %v760 = vadd.f32 %v737, %v759
        %761 = vdwg.mxu0
        %762 = vmatpush.msra.mxu0 %v461
        %763 = vmatpush.msra.mxu0 %v460
        %764 = vmatpush.msra.mxu0 %v459
        %765 = vmatpush.msra.mxu0 %v458
        %766 = vmatpush.msra.mxu0 %v457
        %767 = vmatpush.msra.mxu0 %v456
        %768 = vmatpush.msra.mxu0 %v455
        %769 = vmatpush.msra.mxu0 %v454
        %770 = vmatpush.msra.mxu0 %v453
        %771 = vmatpush.msra.mxu0 %v452
        %772 = vmatpush.msra.mxu0 %v451
        %773 = vmatpush.msra.mxu0 %v450
        %774 = vmatpush.msra.mxu0 %v449
        %775 = vmatpush.msra.mxu0 %v448
        %776 = vmatpush.msra.mxu0 %v447
        %777 = vmatpush.msra.mxu0 %v446
        %778 = vmatmul.f32.gmra.mxu0 %v294
        %v779 = vpop.f32.mrf.mxu0
        %v780 = vadd.f32 %v757, %v779
        %781 = vmatmul.f32.gmra.mxu0 %v310
        %v782 = vpop.f32.mrf.mxu0
        %v783 = vadd.f32 %v760, %v782
        %784 = vdwg.mxu0
        %785 = vmatpush.msra.mxu0 %v477
        %786 = vmatpush.msra.mxu0 %v476
        %787 = vmatpush.msra.mxu0 %v475
        %788 = vmatpush.msra.mxu0 %v474
        %789 = vmatpush.msra.mxu0 %v473
        %790 = vmatpush.msra.mxu0 %v472
        %791 = vmatpush.msra.mxu0 %v471
        %792 = vmatpush.msra.mxu0 %v470
        %793 = vmatpush.msra.mxu0 %v469
        %794 = vmatpush.msra.mxu0 %v468
        %795 = vmatpush.msra.mxu0 %v467
        %796 = vmatpush.msra.mxu0 %v466
        %797 = vmatpush.msra.mxu0 %v465
        %798 = vmatpush.msra.mxu0 %v464
        %799 = vmatpush.msra.mxu0 %v463
        %800 = vmatpush.msra.mxu0 %v462
        %801 = vmatmul.f32.gmra.mxu0 %v295
        %v802 = vpop.f32.mrf.mxu0
        %v803 = vadd.f32 %v780, %v802
        %804 = vmatmul.f32.gmra.mxu0 %v311
        %v805 = vpop.f32.mrf.mxu0
        %v806 = vadd.f32 %v783, %v805
        %807 = vdwg.mxu0
        %808 = vmatpush.msra.mxu0 %v493
        %809 = vmatpush.msra.mxu0 %v492
        %810 = vmatpush.msra.mxu0 %v491
        %811 = vmatpush.msra.mxu0 %v490
        %812 = vmatpush.msra.mxu0 %v489
        %813 = vmatpush.msra.mxu0 %v488
        %814 = vmatpush.msra.mxu0 %v487
        %815 = vmatpush.msra.mxu0 %v486
        %816 = vmatpush.msra.mxu0 %v485
        %817 = vmatpush.msra.mxu0 %v484
        %818 = vmatpush.msra.mxu0 %v483
        %819 = vmatpush.msra.mxu0 %v482
        %820 = vmatpush.msra.mxu0 %v481
        %821 = vmatpush.msra.mxu0 %v480
        %822 = vmatpush.msra.mxu0 %v479
        %823 = vmatpush.msra.mxu0 %v478
        %824 = vmatmul.f32.gmra.mxu0 %v296
        %v825 = vpop.f32.mrf.mxu0
        %v826 = vadd.f32 %v803, %v825
        %827 = vmatmul.f32.gmra.mxu0 %v312
        %v828 = vpop.f32.mrf.mxu0
        %v829 = vadd.f32 %v806, %v828
        %830 = vdwg.mxu0
        %831 = vmatpush.msra.mxu0 %v509
        %832 = vmatpush.msra.mxu0 %v508
        %833 = vmatpush.msra.mxu0 %v507
        %834 = vmatpush.msra.mxu0 %v506
        %835 = vmatpush.msra.mxu0 %v505
        %836 = vmatpush.msra.mxu0 %v504
        %837 = vmatpush.msra.mxu0 %v503
        %838 = vmatpush.msra.mxu0 %v502
        %839 = vmatpush.msra.mxu0 %v501
        %840 = vmatpush.msra.mxu0 %v500
        %841 = vmatpush.msra.mxu0 %v499
        %842 = vmatpush.msra.mxu0 %v498
        %843 = vmatpush.msra.mxu0 %v497
        %844 = vmatpush.msra.mxu0 %v496
        %845 = vmatpush.msra.mxu0 %v495
        %846 = vmatpush.msra.mxu0 %v494
        %847 = vmatmul.f32.gmra.mxu0 %v297
        %v848 = vpop.f32.mrf.mxu0
        %v849 = vadd.f32 %v826, %v848
        %850 = vmatmul.f32.gmra.mxu0 %v313
        %v851 = vpop.f32.mrf.mxu0
        %v852 = vadd.f32 %v829, %v851
        %853 = vdwg.mxu0
        %854 = vmatpush.msra.mxu0 %v525
        %855 = vmatpush.msra.mxu0 %v524
        %856 = vmatpush.msra.mxu0 %v523
        %857 = vmatpush.msra.mxu0 %v522
        %858 = vmatpush.msra.mxu0 %v521
        %859 = vmatpush.msra.mxu0 %v520
        %860 = vmatpush.msra.mxu0 %v519
        %861 = vmatpush.msra.mxu0 %v518
        %862 = vmatpush.msra.mxu0 %v517
        %863 = vmatpush.msra.mxu0 %v516
        %864 = vmatpush.msra.mxu0 %v515
        %865 = vmatpush.msra.mxu0 %v514
        %866 = vmatpush.msra.mxu0 %v513
        %867 = vmatpush.msra.mxu0 %v512
        %868 = vmatpush.msra.mxu0 %v511
        %869 = vmatpush.msra.mxu0 %v510
        %870 = vmatmul.f32.gmra.mxu0 %v298
        %v871 = vpop.f32.mrf.mxu0
        %v872 = vadd.f32 %v849, %v871
        %873 = vmatmul.f32.gmra.mxu0 %v314
        %v874 = vpop.f32.mrf.mxu0
        %v875 = vadd.f32 %v852, %v874
        %876 = vdwg.mxu0
        %877 = vmatpush.msra.mxu0 %v541
        %878 = vmatpush.msra.mxu0 %v540
        %879 = vmatpush.msra.mxu0 %v539
        %880 = vmatpush.msra.mxu0 %v538
        %881 = vmatpush.msra.mxu0 %v537
        %882 = vmatpush.msra.mxu0 %v536
        %883 = vmatpush.msra.mxu0 %v535
        %884 = vmatpush.msra.mxu0 %v534
        %885 = vmatpush.msra.mxu0 %v533
        %886 = vmatpush.msra.mxu0 %v532
        %887 = vmatpush.msra.mxu0 %v531
        %888 = vmatpush.msra.mxu0 %v530
        %889 = vmatpush.msra.mxu0 %v529
        %890 = vmatpush.msra.mxu0 %v528
        %891 = vmatpush.msra.mxu0 %v527
        %892 = vmatpush.msra.mxu0 %v526
        %893 = vmatmul.f32.gmra.mxu0 %v299
        %v894 = vpop.f32.mrf.mxu0
        %v895 = vadd.f32 %v872, %v894
        %896 = vmatmul.f32.gmra.mxu0 %v315
        %v897 = vpop.f32.mrf.mxu0
        %v898 = vadd.f32 %v875, %v897
        %899 = vdwg.mxu0
        %900 = vmatpush.msra.mxu0 %v557
        %901 = vmatpush.msra.mxu0 %v556
        %902 = vmatpush.msra.mxu0 %v555
        %903 = vmatpush.msra.mxu0 %v554
        %904 = vmatpush.msra.mxu0 %v553
        %905 = vmatpush.msra.mxu0 %v552
        %906 = vmatpush.msra.mxu0 %v551
        %907 = vmatpush.msra.mxu0 %v550
        %908 = vmatpush.msra.mxu0 %v549
        %909 = vmatpush.msra.mxu0 %v548
        %910 = vmatpush.msra.mxu0 %v547
        %911 = vmatpush.msra.mxu0 %v546
        %912 = vmatpush.msra.mxu0 %v545
        %913 = vmatpush.msra.mxu0 %v544
        %914 = vmatpush.msra.mxu0 %v543
        %915 = vmatpush.msra.mxu0 %v542
        %916 = vmatmul.f32.gmra.mxu0 %v300
        %v917 = vpop.f32.mrf.mxu0
        %v918 = vadd.f32 %v895, %v917
        %919 = vmatmul.f32.gmra.mxu0 %v316
        %v920 = vpop.f32.mrf.mxu0
        %v921 = vadd.f32 %v898, %v920
        %922 = vdwg.mxu0
        %923 = vmatpush.msra.mxu0 %v573
        %924 = vmatpush.msra.mxu0 %v572
        %925 = vmatpush.msra.mxu0 %v571
        %926 = vmatpush.msra.mxu0 %v570
        %927 = vmatpush.msra.mxu0 %v569
        %928 = vmatpush.msra.mxu0 %v568
        %929 = vmatpush.msra.mxu0 %v567
        %930 = vmatpush.msra.mxu0 %v566
        %931 = vmatpush.msra.mxu0 %v565
        %932 = vmatpush.msra.mxu0 %v564
        %933 = vmatpush.msra.mxu0 %v563
        %934 = vmatpush.msra.mxu0 %v562
        %935 = vmatpush.msra.mxu0 %v561
        %936 = vmatpush.msra.mxu0 %v560
        %937 = vmatpush.msra.mxu0 %v559
        %938 = vmatpush.msra.mxu0 %v558
        %939 = vmatmul.f32.gmra.mxu0 %v301
        %v940 = vpop.f32.mrf.mxu0
        %v941 = vadd.f32 %v918, %v940
        %942 = vmatmul.f32.gmra.mxu0 %v317
        %v943 = vpop.f32.mrf.mxu0
        %v944 = vadd.f32 %v921, %v943
        %945 = vdwg.mxu0
        %v946 = vmax.f32 %v941, 0.0
        %v947 = vmax.f32 %v944, 0.0
        %v948 = vld [vmem:[%s3] sm:$0xff]
        %v949 = vld [vmem:[%s3 + $0x8] sm:$0xff]
        %v950 = vld [vmem:[%s4] sm:$0x1]
        %v952 = vperm.slane %v950, 0
        %vm954 = vcmask 130048
        %v956 = vsel %vm954, %v946, 0
        %v959 = vsel %vm954, %v947, 0
        %961 = vmatpush.msra.mxu0 0.0
        %962 = vmatpush.msra.mxu0 0.0
        %963 = vmatpush.msra.mxu0 0.0
        %964 = vmatpush.msra.mxu0 0.0
        %965 = vmatpush.msra.mxu0 0.0
        %966 = vmatpush.msra.mxu0 0.0
        %967 = vmatpush.msra.mxu0 0.0
        %968 = vmatpush.msra.mxu0 0.0
        %969 = vmatpush.msra.mxu0 0.0
        %970 = vmatpush.msra.mxu0 0.0
        %971 = vmatpush.msra.mxu0 0.0
        %972 = vmatpush.msra.mxu0 0.0
        %973 = vmatpush.msra.mxu0 0.0
        %974 = vmatpush.msra.mxu0 0.0
        %975 = vmatpush.msra.mxu0 %v949
        %976 = vmatpush.msra.mxu0 %v948
        %977 = vmatmul.f32.gmra.mxu0 %v956
        %v978 = vpop.f32.mrf.mxu0
        %v979 = vadd.f32 %v952, %v978
        %980 = vmatmul.f32.gmra.mxu0 %v959
        %v981 = vpop.f32.mrf.mxu0
        %v982 = vadd.f32 %v952, %v981
        %983 = vdwg.mxu0
        %v984 = vxor.u32 %v979, 2147483648
        %v985 = vxor.u32 %v982, 2147483648
        %v986 = vmul.f32 %v984, 1.442695
        %v987 = vpow.pop %v986
        %v988 = vmul.f32 %v985, 1.442695
        %v989 = vpow.pop %v988
        %v990 = vadd.f32 %v987, 1.0
        %v991 = vadd.f32 %v989, 1.0
        %v992 = vrcp.pop %v990
        %v993 = vmul.f32 %v990, %v992
        %v994 = vsub.f32 1.0, %v993
        %v995 = vmul.f32 %v992, %v994
        %v996 = vadd.f32 %v992, %v995
        %vm997 = vweird.f32 %v990
        %vm998 = vweird.f32 %v992
        %vm999 = vmor %vm997, %vm998
        %v1000 = vsel %vm999, %v992, %v996
        %v1001 = vand.u32 2147483647, %v990
        %vm1002 = vcmp.eq.f32.partialorder %v1001, 8.507059e+37
        %v1003 = vand.u32 %v990, 2147483648
        %v1004 = vor.u32 1.1754944e-38, %v1003
        %v1005 = vsel %vm1002, %v1004, %v1000
        %v1006 = vmul.f32 1.0, %v1005
        %v1007 = vrcp.pop %v991
        %v1008 = vmul.f32 %v991, %v1007
        %v1009 = vsub.f32 1.0, %v1008
        %v1010 = vmul.f32 %v1007, %v1009
        %v1011 = vadd.f32 %v1007, %v1010
        %vm1012 = vweird.f32 %v991
        %vm1013 = vweird.f32 %v1007
        %vm1014 = vmor %vm1012, %vm1013
        %v1015 = vsel %vm1014, %v1007, %v1011
        %v1016 = vand.u32 2147483647, %v991
        %vm1017 = vcmp.eq.f32.partialorder %v1016, 8.507059e+37
        %v1018 = vand.u32 %v991, 2147483648
        %v1019 = vor.u32 1.1754944e-38, %v1018
        %v1020 = vsel %vm1017, %v1019, %v1015
        %v1021 = vmul.f32 1.0, %v1020
        %v1022 = vld [vmem:[%s5] sm:$0xff]
        %v1023 = vld [vmem:[%s5 + $0x8] sm:$0xff]
        %v1024 = vld [vmem:[%s5 + $0x40] sm:$0xff]
        %v1025 = vld [vmem:[%s5 + $0x48] sm:$0xff]
        %v1026 = vld [vmem:[%s5 + $0x80] sm:$0xff]
        %v1027 = vld [vmem:[%s5 + $0x88] sm:$0xff]
        %v1028 = vld [vmem:[%s5 + $0xc0] sm:$0xff]
        %v1029 = vld [vmem:[%s5 + $0xc8] sm:$0xff]
        %v1030 = vunpack.c.l.bf16 %v1022
        %v1031 = vunpack.c.h.bf16 %v1022
        %v1032 = vunpack.c.l.bf16 %v1023
        %v1033 = vunpack.c.h.bf16 %v1023
        %v1034 = vunpack.c.l.bf16 %v1024
        %v1035 = vunpack.c.h.bf16 %v1024
        %v1036 = vunpack.c.l.bf16 %v1025
        %v1037 = vunpack.c.h.bf16 %v1025
        %v1038 = vunpack.c.l.bf16 %v1026
        %v1039 = vunpack.c.h.bf16 %v1026
        %v1040 = vunpack.c.l.bf16 %v1027
        %v1041 = vunpack.c.h.bf16 %v1027
        %v1042 = vunpack.c.l.bf16 %v1028
        %v1043 = vunpack.c.h.bf16 %v1028
        %v1044 = vunpack.c.l.bf16 %v1029
        %v1045 = vunpack.c.h.bf16 %v1029
        %vm1046 = vcmask 261120
        %v1048 = vsel %vm1046, %v1006, 0
        %v1051 = vsel %vm1046, %v1021, 0
        %1053 = vmatpush.msra.mxu0 0.0
        %1054 = vmatpush.msra.mxu0 0.0
        %1055 = vmatpush.msra.mxu0 0.0
        %1056 = vmatpush.msra.mxu0 0.0
        %1057 = vmatpush.msra.mxu0 0.0
        %1058 = vmatpush.msra.mxu0 0.0
        %1059 = vmatpush.msra.mxu0 0.0
        %1060 = vmatpush.msra.mxu0 0.0
        %1061 = vmatpush.msra.mxu0 0.0
        %1062 = vmatpush.msra.mxu0 0.0
        %1063 = vmatpush.msra.mxu0 0.0
        %1064 = vmatpush.msra.mxu0 0.0
        %1065 = vmatpush.msra.mxu0 %v1042
        %1066 = vmatpush.msra.mxu0 %v1038
        %1067 = vmatpush.msra.mxu0 %v1034
        %1068 = vmatpush.msra.mxu0 %v1030
        %1069 = vmatmul.f32.gmra.mxu0 %v1048
        %v1070 = vpop.f32.mrf.mxu0
        %v1071 = vadd.f32 0.0, %v1070
        %1072 = vmatmul.f32.gmra.mxu0 %v1051
        %v1073 = vpop.f32.mrf.mxu0
        %v1074 = vadd.f32 0.0, %v1073
        %1075 = vdwg.mxu0
        %1076 = vmatpush.msra.mxu0 0.0
        %1077 = vmatpush.msra.mxu0 0.0
        %1078 = vmatpush.msra.mxu0 0.0
        %1079 = vmatpush.msra.mxu0 0.0
        %1080 = vmatpush.msra.mxu0 0.0
        %1081 = vmatpush.msra.mxu0 0.0
        %1082 = vmatpush.msra.mxu0 0.0
        %1083 = vmatpush.msra.mxu0 0.0
        %1084 = vmatpush.msra.mxu0 0.0
        %1085 = vmatpush.msra.mxu0 0.0
        %1086 = vmatpush.msra.mxu0 0.0
        %1087 = vmatpush.msra.mxu0 0.0
        %1088 = vmatpush.msra.mxu0 %v1043
        %1089 = vmatpush.msra.mxu0 %v1039
        %1090 = vmatpush.msra.mxu0 %v1035
        %1091 = vmatpush.msra.mxu0 %v1031
        %1092 = vmatmul.f32.gmra.mxu0 %v1048
        %v1093 = vpop.f32.mrf.mxu0
        %v1094 = vadd.f32 0.0, %v1093
        %1095 = vmatmul.f32.gmra.mxu0 %v1051
        %v1096 = vpop.f32.mrf.mxu0
        %v1097 = vadd.f32 0.0, %v1096
        %1098 = vdwg.mxu0
        %1099 = vmatpush.msra.mxu0 0.0
        %1100 = vmatpush.msra.mxu0 0.0
        %1101 = vmatpush.msra.mxu0 0.0
        %1102 = vmatpush.msra.mxu0 0.0
        %1103 = vmatpush.msra.mxu0 0.0
        %1104 = vmatpush.msra.mxu0 0.0
        %1105 = vmatpush.msra.mxu0 0.0
        %1106 = vmatpush.msra.mxu0 0.0
        %1107 = vmatpush.msra.mxu0 0.0
        %1108 = vmatpush.msra.mxu0 0.0
        %1109 = vmatpush.msra.mxu0 0.0
        %1110 = vmatpush.msra.mxu0 0.0
        %1111 = vmatpush.msra.mxu0 %v1044
        %1112 = vmatpush.msra.mxu0 %v1040
        %1113 = vmatpush.msra.mxu0 %v1036
        %1114 = vmatpush.msra.mxu0 %v1032
        %1115 = vmatmul.f32.gmra.mxu0 %v1048
        %v1116 = vpop.f32.mrf.mxu0
        %v1117 = vadd.f32 0.0, %v1116
        %1118 = vmatmul.f32.gmra.mxu0 %v1051
        %v1119 = vpop.f32.mrf.mxu0
        %v1120 = vadd.f32 0.0, %v1119
        %1121 = vdwg.mxu0
        %1122 = vmatpush.msra.mxu0 0.0
        %1123 = vmatpush.msra.mxu0 0.0
        %1124 = vmatpush.msra.mxu0 0.0
        %1125 = vmatpush.msra.mxu0 0.0
        %1126 = vmatpush.msra.mxu0 0.0
        %1127 = vmatpush.msra.mxu0 0.0
        %1128 = vmatpush.msra.mxu0 0.0
        %1129 = vmatpush.msra.mxu0 0.0
        %1130 = vmatpush.msra.mxu0 0.0
        %1131 = vmatpush.msra.mxu0 0.0
        %1132 = vmatpush.msra.mxu0 0.0
        %1133 = vmatpush.msra.mxu0 0.0
        %1134 = vmatpush.msra.mxu0 %v1045
        %1135 = vmatpush.msra.mxu0 %v1041
        %1136 = vmatpush.msra.mxu0 %v1037
        %1137 = vmatpush.msra.mxu0 %v1033
        %1138 = vmatmul.f32.gmra.mxu0 %v1048
        %v1139 = vpop.f32.mrf.mxu0
        %v1140 = vadd.f32 0.0, %v1139
        %1141 = vmatmul.f32.gmra.mxu0 %v1051
        %v1142 = vpop.f32.mrf.mxu0
        %v1143 = vadd.f32 0.0, %v1142
        %1144 = vdwg.mxu0
        %v1145 = vld [vmem:[%s273] sm:$0xff]
        %v1146 = vld [vmem:[%s273 + $0x8] sm:$0xff]
        %v1147 = vld [vmem:[%s273 + $0x10] sm:$0xff]
        %v1148 = vld [vmem:[%s273 + $0x18] sm:$0xff]
        %v1149 = vld [vmem:[%s273 + $0x80] sm:$0xff]
        %v1150 = vld [vmem:[%s273 + $0x88] sm:$0xff]
        %v1151 = vld [vmem:[%s273 + $0x90] sm:$0xff]
        %v1152 = vld [vmem:[%s273 + $0x98] sm:$0xff]
        %v1153 = vmul.f32 %v1145, %v1071
        %v1154 = vmul.f32 %v1146, %v1094
        %v1155 = vmul.f32 %v1147, %v1117
        %v1156 = vmul.f32 %v1148, %v1140
        %v1157 = vmul.f32 %v1149, %v1074
        %v1158 = vmul.f32 %v1150, %v1097
        %v1159 = vmul.f32 %v1151, %v1120
        %v1160 = vmul.f32 %v1152, %v1143
        %1161 = vst [vmem:[%s262] sm:$0xff] %v1153
        %1162 = vst [vmem:[%s262 + $0x8] sm:$0xff] %v1154
        %1163 = vst [vmem:[%s262 + $0x10] sm:$0xff] %v1155
        %1164 = vst [vmem:[%s262 + $0x18] sm:$0xff] %v1156
        %1165 = vst [vmem:[%s262 + $0x80] sm:$0xff] %v1157
        %1166 = vst [vmem:[%s262 + $0x88] sm:$0xff] %v1158
        %1167 = vst [vmem:[%s262 + $0x90] sm:$0xff] %v1159
        %1168 = vst [vmem:[%s262 + $0x98] sm:$0xff] %v1160
        %v1169 = vld [vmem:[%s5 + $0x10] sm:$0xff]
        %v1170 = vld [vmem:[%s5 + $0x18] sm:$0xff]
        %v1171 = vld [vmem:[%s5 + $0x50] sm:$0xff]
        %v1172 = vld [vmem:[%s5 + $0x58] sm:$0xff]
        %v1173 = vld [vmem:[%s5 + $0x90] sm:$0xff]
        %v1174 = vld [vmem:[%s5 + $0x98] sm:$0xff]
        %v1175 = vld [vmem:[%s5 + $0xd0] sm:$0xff]
        %v1176 = vld [vmem:[%s5 + $0xd8] sm:$0xff]
        %v1177 = vunpack.c.l.bf16 %v1169
        %v1178 = vunpack.c.h.bf16 %v1169
        %v1179 = vunpack.c.l.bf16 %v1170
        %v1180 = vunpack.c.h.bf16 %v1170
        %v1181 = vunpack.c.l.bf16 %v1171
        %v1182 = vunpack.c.h.bf16 %v1171
        %v1183 = vunpack.c.l.bf16 %v1172
        %v1184 = vunpack.c.h.bf16 %v1172
        %v1185 = vunpack.c.l.bf16 %v1173
        %v1186 = vunpack.c.h.bf16 %v1173
        %v1187 = vunpack.c.l.bf16 %v1174
        %v1188 = vunpack.c.h.bf16 %v1174
        %v1189 = vunpack.c.l.bf16 %v1175
        %v1190 = vunpack.c.h.bf16 %v1175
        %v1191 = vunpack.c.l.bf16 %v1176
        %v1192 = vunpack.c.h.bf16 %v1176
        %1193 = vmatpush.msra.mxu0 0.0
        %1194 = vmatpush.msra.mxu0 0.0
        %1195 = vmatpush.msra.mxu0 0.0
        %1196 = vmatpush.msra.mxu0 0.0
        %1197 = vmatpush.msra.mxu0 0.0
        %1198 = vmatpush.msra.mxu0 0.0
        %1199 = vmatpush.msra.mxu0 0.0
        %1200 = vmatpush.msra.mxu0 0.0
        %1201 = vmatpush.msra.mxu0 0.0
        %1202 = vmatpush.msra.mxu0 0.0
        %1203 = vmatpush.msra.mxu0 0.0
        %1204 = vmatpush.msra.mxu0 0.0
        %1205 = vmatpush.msra.mxu0 %v1189
        %1206 = vmatpush.msra.mxu0 %v1185
        %1207 = vmatpush.msra.mxu0 %v1181
        %1208 = vmatpush.msra.mxu0 %v1177
        %1209 = vmatmul.f32.gmra.mxu0 %v1048
        %v1210 = vpop.f32.mrf.mxu0
        %v1211 = vadd.f32 0.0, %v1210
        %1212 = vmatmul.f32.gmra.mxu0 %v1051
        %v1213 = vpop.f32.mrf.mxu0
        %v1214 = vadd.f32 0.0, %v1213
        %1215 = vdwg.mxu0
        %1216 = vmatpush.msra.mxu0 0.0
        %1217 = vmatpush.msra.mxu0 0.0
        %1218 = vmatpush.msra.mxu0 0.0
        %1219 = vmatpush.msra.mxu0 0.0
        %1220 = vmatpush.msra.mxu0 0.0
        %1221 = vmatpush.msra.mxu0 0.0
        %1222 = vmatpush.msra.mxu0 0.0
        %1223 = vmatpush.msra.mxu0 0.0
        %1224 = vmatpush.msra.mxu0 0.0
        %1225 = vmatpush.msra.mxu0 0.0
        %1226 = vmatpush.msra.mxu0 0.0
        %1227 = vmatpush.msra.mxu0 0.0
        %1228 = vmatpush.msra.mxu0 %v1190
        %1229 = vmatpush.msra.mxu0 %v1186
        %1230 = vmatpush.msra.mxu0 %v1182
        %1231 = vmatpush.msra.mxu0 %v1178
        %1232 = vmatmul.f32.gmra.mxu0 %v1048
        %v1233 = vpop.f32.mrf.mxu0
        %v1234 = vadd.f32 0.0, %v1233
        %1235 = vmatmul.f32.gmra.mxu0 %v1051
        %v1236 = vpop.f32.mrf.mxu0
        %v1237 = vadd.f32 0.0, %v1236
        %1238 = vdwg.mxu0
        %1239 = vmatpush.msra.mxu0 0.0
        %1240 = vmatpush.msra.mxu0 0.0
        %1241 = vmatpush.msra.mxu0 0.0
        %1242 = vmatpush.msra.mxu0 0.0
        %1243 = vmatpush.msra.mxu0 0.0
        %1244 = vmatpush.msra.mxu0 0.0
        %1245 = vmatpush.msra.mxu0 0.0
        %1246 = vmatpush.msra.mxu0 0.0
        %1247 = vmatpush.msra.mxu0 0.0
        %1248 = vmatpush.msra.mxu0 0.0
        %1249 = vmatpush.msra.mxu0 0.0
        %1250 = vmatpush.msra.mxu0 0.0
        %1251 = vmatpush.msra.mxu0 %v1191
        %1252 = vmatpush.msra.mxu0 %v1187
        %1253 = vmatpush.msra.mxu0 %v1183
        %1254 = vmatpush.msra.mxu0 %v1179
        %1255 = vmatmul.f32.gmra.mxu0 %v1048
        %v1256 = vpop.f32.mrf.mxu0
        %v1257 = vadd.f32 0.0, %v1256
        %1258 = vmatmul.f32.gmra.mxu0 %v1051
        %v1259 = vpop.f32.mrf.mxu0
        %v1260 = vadd.f32 0.0, %v1259
        %1261 = vdwg.mxu0
        %1262 = vmatpush.msra.mxu0 0.0
        %1263 = vmatpush.msra.mxu0 0.0
        %1264 = vmatpush.msra.mxu0 0.0
        %1265 = vmatpush.msra.mxu0 0.0
        %1266 = vmatpush.msra.mxu0 0.0
        %1267 = vmatpush.msra.mxu0 0.0
        %1268 = vmatpush.msra.mxu0 0.0
        %1269 = vmatpush.msra.mxu0 0.0
        %1270 = vmatpush.msra.mxu0 0.0
        %1271 = vmatpush.msra.mxu0 0.0
        %1272 = vmatpush.msra.mxu0 0.0
        %1273 = vmatpush.msra.mxu0 0.0
        %1274 = vmatpush.msra.mxu0 %v1192
        %1275 = vmatpush.msra.mxu0 %v1188
        %1276 = vmatpush.msra.mxu0 %v1184
        %1277 = vmatpush.msra.mxu0 %v1180
        %1278 = vmatmul.f32.gmra.mxu0 %v1048
        %v1279 = vpop.f32.mrf.mxu0
        %v1280 = vadd.f32 0.0, %v1279
        %1281 = vmatmul.f32.gmra.mxu0 %v1051
        %v1282 = vpop.f32.mrf.mxu0
        %v1283 = vadd.f32 0.0, %v1282
        %1284 = vdwg.mxu0
        %v1285 = vld [vmem:[%s273 + $0x20] sm:$0xff]
        %v1286 = vld [vmem:[%s273 + $0x28] sm:$0xff]
        %v1287 = vld [vmem:[%s273 + $0x30] sm:$0xff]
        %v1288 = vld [vmem:[%s273 + $0x38] sm:$0xff]
        %v1289 = vld [vmem:[%s273 + $0xa0] sm:$0xff]
        %v1290 = vld [vmem:[%s273 + $0xa8] sm:$0xff]
        %v1291 = vld [vmem:[%s273 + $0xb0] sm:$0xff]
        %v1292 = vld [vmem:[%s273 + $0xb8] sm:$0xff]
        %v1293 = vmul.f32 %v1285, %v1211
        %v1294 = vmul.f32 %v1286, %v1234
        %v1295 = vmul.f32 %v1287, %v1257
        %v1296 = vmul.f32 %v1288, %v1280
        %v1297 = vmul.f32 %v1289, %v1214
        %v1298 = vmul.f32 %v1290, %v1237
        %v1299 = vmul.f32 %v1291, %v1260
        %v1300 = vmul.f32 %v1292, %v1283
        %1301 = vst [vmem:[%s262 + $0x20] sm:$0xff] %v1293
        %1302 = vst [vmem:[%s262 + $0x28] sm:$0xff] %v1294
        %1303 = vst [vmem:[%s262 + $0x30] sm:$0xff] %v1295
        %1304 = vst [vmem:[%s262 + $0x38] sm:$0xff] %v1296
        %1305 = vst [vmem:[%s262 + $0xa0] sm:$0xff] %v1297
        %1306 = vst [vmem:[%s262 + $0xa8] sm:$0xff] %v1298
        %1307 = vst [vmem:[%s262 + $0xb0] sm:$0xff] %v1299
        %1308 = vst [vmem:[%s262 + $0xb8] sm:$0xff] %v1300
        %v1309 = vld [vmem:[%s5 + $0x20] sm:$0xff]
        %v1310 = vld [vmem:[%s5 + $0x28] sm:$0xff]
        %v1311 = vld [vmem:[%s5 + $0x60] sm:$0xff]
        %v1312 = vld [vmem:[%s5 + $0x68] sm:$0xff]
        %v1313 = vld [vmem:[%s5 + $0xa0] sm:$0xff]
        %v1314 = vld [vmem:[%s5 + $0xa8] sm:$0xff]
        %v1315 = vld [vmem:[%s5 + $0xe0] sm:$0xff]
        %v1316 = vld [vmem:[%s5 + $0xe8] sm:$0xff]
        %v1317 = vunpack.c.l.bf16 %v1309
        %v1318 = vunpack.c.h.bf16 %v1309
        %v1319 = vunpack.c.l.bf16 %v1310
        %v1320 = vunpack.c.h.bf16 %v1310
        %v1321 = vunpack.c.l.bf16 %v1311
        %v1322 = vunpack.c.h.bf16 %v1311
        %v1323 = vunpack.c.l.bf16 %v1312
        %v1324 = vunpack.c.h.bf16 %v1312
        %v1325 = vunpack.c.l.bf16 %v1313
        %v1326 = vunpack.c.h.bf16 %v1313
        %v1327 = vunpack.c.l.bf16 %v1314
        %v1328 = vunpack.c.h.bf16 %v1314
        %v1329 = vunpack.c.l.bf16 %v1315
        %v1330 = vunpack.c.h.bf16 %v1315
        %v1331 = vunpack.c.l.bf16 %v1316
        %v1332 = vunpack.c.h.bf16 %v1316
        %1333 = vmatpush.msra.mxu0 0.0
        %1334 = vmatpush.msra.mxu0 0.0
        %1335 = vmatpush.msra.mxu0 0.0
        %1336 = vmatpush.msra.mxu0 0.0
        %1337 = vmatpush.msra.mxu0 0.0
        %1338 = vmatpush.msra.mxu0 0.0
        %1339 = vmatpush.msra.mxu0 0.0
        %1340 = vmatpush.msra.mxu0 0.0
        %1341 = vmatpush.msra.mxu0 0.0
        %1342 = vmatpush.msra.mxu0 0.0
        %1343 = vmatpush.msra.mxu0 0.0
        %1344 = vmatpush.msra.mxu0 0.0
        %1345 = vmatpush.msra.mxu0 %v1329
        %1346 = vmatpush.msra.mxu0 %v1325
        %1347 = vmatpush.msra.mxu0 %v1321
        %1348 = vmatpush.msra.mxu0 %v1317
        %1349 = vmatmul.f32.gmra.mxu0 %v1048
        %v1350 = vpop.f32.mrf.mxu0
        %v1351 = vadd.f32 0.0, %v1350
        %1352 = vmatmul.f32.gmra.mxu0 %v1051
        %v1353 = vpop.f32.mrf.mxu0
        %v1354 = vadd.f32 0.0, %v1353
        %1355 = vdwg.mxu0
        %1356 = vmatpush.msra.mxu0 0.0
        %1357 = vmatpush.msra.mxu0 0.0
        %1358 = vmatpush.msra.mxu0 0.0
        %1359 = vmatpush.msra.mxu0 0.0
        %1360 = vmatpush.msra.mxu0 0.0
        %1361 = vmatpush.msra.mxu0 0.0
        %1362 = vmatpush.msra.mxu0 0.0
        %1363 = vmatpush.msra.mxu0 0.0
        %1364 = vmatpush.msra.mxu0 0.0
        %1365 = vmatpush.msra.mxu0 0.0
        %1366 = vmatpush.msra.mxu0 0.0
        %1367 = vmatpush.msra.mxu0 0.0
        %1368 = vmatpush.msra.mxu0 %v1330
        %1369 = vmatpush.msra.mxu0 %v1326
        %1370 = vmatpush.msra.mxu0 %v1322
        %1371 = vmatpush.msra.mxu0 %v1318
        %1372 = vmatmul.f32.gmra.mxu0 %v1048
        %v1373 = vpop.f32.mrf.mxu0
        %v1374 = vadd.f32 0.0, %v1373
        %1375 = vmatmul.f32.gmra.mxu0 %v1051
        %v1376 = vpop.f32.mrf.mxu0
        %v1377 = vadd.f32 0.0, %v1376
        %1378 = vdwg.mxu0
        %1379 = vmatpush.msra.mxu0 0.0
        %1380 = vmatpush.msra.mxu0 0.0
        %1381 = vmatpush.msra.mxu0 0.0
        %1382 = vmatpush.msra.mxu0 0.0
        %1383 = vmatpush.msra.mxu0 0.0
        %1384 = vmatpush.msra.mxu0 0.0
        %1385 = vmatpush.msra.mxu0 0.0
        %1386 = vmatpush.msra.mxu0 0.0
        %1387 = vmatpush.msra.mxu0 0.0
        %1388 = vmatpush.msra.mxu0 0.0
        %1389 = vmatpush.msra.mxu0 0.0
        %1390 = vmatpush.msra.mxu0 0.0
        %1391 = vmatpush.msra.mxu0 %v1331
        %1392 = vmatpush.msra.mxu0 %v1327
        %1393 = vmatpush.msra.mxu0 %v1323
        %1394 = vmatpush.msra.mxu0 %v1319
        %1395 = vmatmul.f32.gmra.mxu0 %v1048
        %v1396 = vpop.f32.mrf.mxu0
        %v1397 = vadd.f32 0.0, %v1396
        %1398 = vmatmul.f32.gmra.mxu0 %v1051
        %v1399 = vpop.f32.mrf.mxu0
        %v1400 = vadd.f32 0.0, %v1399
        %1401 = vdwg.mxu0
        %1402 = vmatpush.msra.mxu0 0.0
        %1403 = vmatpush.msra.mxu0 0.0
        %1404 = vmatpush.msra.mxu0 0.0
        %1405 = vmatpush.msra.mxu0 0.0
        %1406 = vmatpush.msra.mxu0 0.0
        %1407 = vmatpush.msra.mxu0 0.0
        %1408 = vmatpush.msra.mxu0 0.0
        %1409 = vmatpush.msra.mxu0 0.0
        %1410 = vmatpush.msra.mxu0 0.0
        %1411 = vmatpush.msra.mxu0 0.0
        %1412 = vmatpush.msra.mxu0 0.0
        %1413 = vmatpush.msra.mxu0 0.0
        %1414 = vmatpush.msra.mxu0 %v1332
        %1415 = vmatpush.msra.mxu0 %v1328
        %1416 = vmatpush.msra.mxu0 %v1324
        %1417 = vmatpush.msra.mxu0 %v1320
        %1418 = vmatmul.f32.gmra.mxu0 %v1048
        %v1419 = vpop.f32.mrf.mxu0
        %v1420 = vadd.f32 0.0, %v1419
        %1421 = vmatmul.f32.gmra.mxu0 %v1051
        %v1422 = vpop.f32.mrf.mxu0
        %v1423 = vadd.f32 0.0, %v1422
        %1424 = vdwg.mxu0
        %v1425 = vld [vmem:[%s273 + $0x40] sm:$0xff]
        %v1426 = vld [vmem:[%s273 + $0x48] sm:$0xff]
        %v1427 = vld [vmem:[%s273 + $0x50] sm:$0xff]
        %v1428 = vld [vmem:[%s273 + $0x58] sm:$0xff]
        %v1429 = vld [vmem:[%s273 + $0xc0] sm:$0xff]
        %v1430 = vld [vmem:[%s273 + $0xc8] sm:$0xff]
        %v1431 = vld [vmem:[%s273 + $0xd0] sm:$0xff]
        %v1432 = vld [vmem:[%s273 + $0xd8] sm:$0xff]
        %v1433 = vmul.f32 %v1425, %v1351
        %v1434 = vmul.f32 %v1426, %v1374
        %v1435 = vmul.f32 %v1427, %v1397
        %v1436 = vmul.f32 %v1428, %v1420
        %v1437 = vmul.f32 %v1429, %v1354
        %v1438 = vmul.f32 %v1430, %v1377
        %v1439 = vmul.f32 %v1431, %v1400
        %v1440 = vmul.f32 %v1432, %v1423
        %1441 = vst [vmem:[%s262 + $0x40] sm:$0xff] %v1433
        %1442 = vst [vmem:[%s262 + $0x48] sm:$0xff] %v1434
        %1443 = vst [vmem:[%s262 + $0x50] sm:$0xff] %v1435
        %1444 = vst [vmem:[%s262 + $0x58] sm:$0xff] %v1436
        %1445 = vst [vmem:[%s262 + $0xc0] sm:$0xff] %v1437
        %1446 = vst [vmem:[%s262 + $0xc8] sm:$0xff] %v1438
        %1447 = vst [vmem:[%s262 + $0xd0] sm:$0xff] %v1439
        %1448 = vst [vmem:[%s262 + $0xd8] sm:$0xff] %v1440
        %v1449 = vld [vmem:[%s5 + $0x30] sm:$0xff]
        %v1450 = vld [vmem:[%s5 + $0x38] sm:$0xff]
        %v1451 = vld [vmem:[%s5 + $0x70] sm:$0xff]
        %v1452 = vld [vmem:[%s5 + $0x78] sm:$0xff]
        %v1453 = vld [vmem:[%s5 + $0xb0] sm:$0xff]
        %v1454 = vld [vmem:[%s5 + $0xb8] sm:$0xff]
        %v1455 = vld [vmem:[%s5 + $0xf0] sm:$0xff]
        %v1456 = vld [vmem:[%s5 + $0xf8] sm:$0xff]
        %v1457 = vunpack.c.l.bf16 %v1449
        %v1458 = vunpack.c.h.bf16 %v1449
        %v1459 = vunpack.c.l.bf16 %v1450
        %v1460 = vunpack.c.h.bf16 %v1450
        %v1461 = vunpack.c.l.bf16 %v1451
        %v1462 = vunpack.c.h.bf16 %v1451
        %v1463 = vunpack.c.l.bf16 %v1452
        %v1464 = vunpack.c.h.bf16 %v1452
        %v1465 = vunpack.c.l.bf16 %v1453
        %v1466 = vunpack.c.h.bf16 %v1453
        %v1467 = vunpack.c.l.bf16 %v1454
        %v1468 = vunpack.c.h.bf16 %v1454
        %v1469 = vunpack.c.l.bf16 %v1455
        %v1470 = vunpack.c.h.bf16 %v1455
        %v1471 = vunpack.c.l.bf16 %v1456
        %v1472 = vunpack.c.h.bf16 %v1456
        %1473 = vmatpush.msra.mxu0 0.0
        %1474 = vmatpush.msra.mxu0 0.0
        %1475 = vmatpush.msra.mxu0 0.0
        %1476 = vmatpush.msra.mxu0 0.0
        %1477 = vmatpush.msra.mxu0 0.0
        %1478 = vmatpush.msra.mxu0 0.0
        %1479 = vmatpush.msra.mxu0 0.0
        %1480 = vmatpush.msra.mxu0 0.0
        %1481 = vmatpush.msra.mxu0 0.0
        %1482 = vmatpush.msra.mxu0 0.0
        %1483 = vmatpush.msra.mxu0 0.0
        %1484 = vmatpush.msra.mxu0 0.0
        %1485 = vmatpush.msra.mxu0 %v1469
        %1486 = vmatpush.msra.mxu0 %v1465
        %1487 = vmatpush.msra.mxu0 %v1461
        %1488 = vmatpush.msra.mxu0 %v1457
        %1489 = vmatmul.f32.gmra.mxu0 %v1048
        %v1490 = vpop.f32.mrf.mxu0
        %v1491 = vadd.f32 0.0, %v1490
        %1492 = vmatmul.f32.gmra.mxu0 %v1051
        %v1493 = vpop.f32.mrf.mxu0
        %v1494 = vadd.f32 0.0, %v1493
        %1495 = vdwg.mxu0
        %1496 = vmatpush.msra.mxu0 0.0
        %1497 = vmatpush.msra.mxu0 0.0
        %1498 = vmatpush.msra.mxu0 0.0
        %1499 = vmatpush.msra.mxu0 0.0
        %1500 = vmatpush.msra.mxu0 0.0
        %1501 = vmatpush.msra.mxu0 0.0
        %1502 = vmatpush.msra.mxu0 0.0
        %1503 = vmatpush.msra.mxu0 0.0
        %1504 = vmatpush.msra.mxu0 0.0
        %1505 = vmatpush.msra.mxu0 0.0
        %1506 = vmatpush.msra.mxu0 0.0
        %1507 = vmatpush.msra.mxu0 0.0
        %1508 = vmatpush.msra.mxu0 %v1470
        %1509 = vmatpush.msra.mxu0 %v1466
        %1510 = vmatpush.msra.mxu0 %v1462
        %1511 = vmatpush.msra.mxu0 %v1458
        %1512 = vmatmul.f32.gmra.mxu0 %v1048
        %v1513 = vpop.f32.mrf.mxu0
        %v1514 = vadd.f32 0.0, %v1513
        %1515 = vmatmul.f32.gmra.mxu0 %v1051
        %v1516 = vpop.f32.mrf.mxu0
        %v1517 = vadd.f32 0.0, %v1516
        %1518 = vdwg.mxu0
        %1519 = vmatpush.msra.mxu0 0.0
        %1520 = vmatpush.msra.mxu0 0.0
        %1521 = vmatpush.msra.mxu0 0.0
        %1522 = vmatpush.msra.mxu0 0.0
        %1523 = vmatpush.msra.mxu0 0.0
        %1524 = vmatpush.msra.mxu0 0.0
        %1525 = vmatpush.msra.mxu0 0.0
        %1526 = vmatpush.msra.mxu0 0.0
        %1527 = vmatpush.msra.mxu0 0.0
        %1528 = vmatpush.msra.mxu0 0.0
        %1529 = vmatpush.msra.mxu0 0.0
        %1530 = vmatpush.msra.mxu0 0.0
        %1531 = vmatpush.msra.mxu0 %v1471
        %1532 = vmatpush.msra.mxu0 %v1467
        %1533 = vmatpush.msra.mxu0 %v1463
        %1534 = vmatpush.msra.mxu0 %v1459
        %1535 = vmatmul.f32.gmra.mxu0 %v1048
        %v1536 = vpop.f32.mrf.mxu0
        %v1537 = vadd.f32 0.0, %v1536
        %1538 = vmatmul.f32.gmra.mxu0 %v1051
        %v1539 = vpop.f32.mrf.mxu0
        %v1540 = vadd.f32 0.0, %v1539
        %1541 = vdwg.mxu0
        %1542 = vmatpush.msra.mxu0 0.0
        %1543 = vmatpush.msra.mxu0 0.0
        %1544 = vmatpush.msra.mxu0 0.0
        %1545 = vmatpush.msra.mxu0 0.0
        %1546 = vmatpush.msra.mxu0 0.0
        %1547 = vmatpush.msra.mxu0 0.0
        %1548 = vmatpush.msra.mxu0 0.0
        %1549 = vmatpush.msra.mxu0 0.0
        %1550 = vmatpush.msra.mxu0 0.0
        %1551 = vmatpush.msra.mxu0 0.0
        %1552 = vmatpush.msra.mxu0 0.0
        %1553 = vmatpush.msra.mxu0 0.0
        %1554 = vmatpush.msra.mxu0 %v1472
        %1555 = vmatpush.msra.mxu0 %v1468
        %1556 = vmatpush.msra.mxu0 %v1464
        %1557 = vmatpush.msra.mxu0 %v1460
        %1558 = vmatmul.f32.gmra.mxu0 %v1048
        %v1559 = vpop.f32.mrf.mxu0
        %v1560 = vadd.f32 0.0, %v1559
        %1561 = vmatmul.f32.gmra.mxu0 %v1051
        %v1562 = vpop.f32.mrf.mxu0
        %v1563 = vadd.f32 0.0, %v1562
        %1564 = vdwg.mxu0
        %v1565 = vld [vmem:[%s273 + $0x60] sm:$0xff]
        %v1566 = vld [vmem:[%s273 + $0x68] sm:$0xff]
        %v1567 = vld [vmem:[%s273 + $0x70] sm:$0xff]
        %v1568 = vld [vmem:[%s273 + $0x78] sm:$0xff]
        %v1569 = vld [vmem:[%s273 + $0xe0] sm:$0xff]
        %v1570 = vld [vmem:[%s273 + $0xe8] sm:$0xff]
        %v1571 = vld [vmem:[%s273 + $0xf0] sm:$0xff]
        %v1572 = vld [vmem:[%s273 + $0xf8] sm:$0xff]
        %v1573 = vmul.f32 %v1565, %v1491
        %v1574 = vmul.f32 %v1566, %v1514
        %v1575 = vmul.f32 %v1567, %v1537
        %v1576 = vmul.f32 %v1568, %v1560
        %v1577 = vmul.f32 %v1569, %v1494
        %v1578 = vmul.f32 %v1570, %v1517
        %v1579 = vmul.f32 %v1571, %v1540
        %v1580 = vmul.f32 %v1572, %v1563
        %1581 = vst [vmem:[%s262 + $0x60] sm:$0xff] %v1573
        %1582 = vst [vmem:[%s262 + $0x68] sm:$0xff] %v1574
        %1583 = vst [vmem:[%s262 + $0x70] sm:$0xff] %v1575
        %1584 = vst [vmem:[%s262 + $0x78] sm:$0xff] %v1576
        %1585 = vst [vmem:[%s262 + $0xe0] sm:$0xff] %v1577
        %1586 = vst [vmem:[%s262 + $0xe8] sm:$0xff] %v1578
        %1587 = vst [vmem:[%s262 + $0xf0] sm:$0xff] %v1579
        %1588 = vst [vmem:[%s262 + $0xf8] sm:$0xff] %v1580
        %s1589 = sand.u32 %s159, 1
        %s1590 = scalar_lea.sflag [#allocation3], %s1589
        %s1591 = sand.u32 %s159, 1
        %s1592 = smul.addr %s1591, 256
        %s1593 = scalar_lea.vmem [#allocation2], %s1592
        // Predicated region
        $region45: #{tpu_custom_call.1} parent=43 // pred_check
          %p1594 = pneg %p169
        $region46: #{tpu_custom_call.1} parent=43 // pred_check_branch
          %1596 = sbr.rel (%p1594) target = $region48
        $region47: #{tpu_custom_call.1} parent=43 // pred_region
          %s1597 = smul.u32 2, %s20
          %s1598 = ssub.s32 3, %s1597
          %p1599 = scmp.lt.s32.totalorder %s1598, 2
          %s1600 = scalar_select %p1599, %s1598, 2
          %s1601 = smul.u32 8, %s1600
          %s1602 = smul.u32 %s1601, 16
          %s1603 = ssub.s32 256, %s1602
          %s1604 = sshll.u32 %s1603, 4
          %1605 = vsyncadd %s1590, %s1604
          %p1606 = scmp.ne.s32.totalorder 0, %s1602
          %s1607 = smul.addr %s1597, 16
          %s1608 = smul.addr %s1607, 8
          %s1609 = scalar_lea.hbm %s6, %s1608
          %s1610 = smul.u32 128, %s1600
          %s1611 = sshll.u32 %s1593, 4
          %s1612 = int_to_ptr.vmem [resolvable:$true] %s1611
          %s1613 = sshll.u32 %s1609, 4
          %s1614 = int_to_ptr.hbm [resolvable:$true] %s1613
          %s1615 = sshll.u32 %s1610, 4
          %1619 = dma.vmem_to_hbm [thread:$0]  (%p1606), %s1612, %s1615, %s1614, %s1590, 2048, 2048, 128
        $region48: #{tpu_custom_call.1} parent=43 // pred_fallthru
          _
      $region44: #{tpu_custom_call.1} parent=5 // pred_fallthru
        _
      %p1620 = scmp.le.s32.totalorder 2, %s15
      // Predicated region
      $region49: #{tpu_custom_call.1} parent=5 // pred_check
        %p1621 = pneg %p1620
      $region50: #{tpu_custom_call.1} parent=5 // pred_check_branch
        %1623 = sbr.rel (%p1621) target = $region52
      $region51: #{tpu_custom_call.1} parent=5 // pred_region
        %s1624 = ssub.s32 %s15, 2
        // Predicated region
        $region53: #{tpu_custom_call.1} parent=51 // pred_check
          %p1625 = pneg %p175
        $region54: #{tpu_custom_call.1} parent=51 // pred_check_branch
          %1627 = sbr.rel (%p1625) target = $region56
        $region55: #{tpu_custom_call.1} parent=51 // pred_region
          %s1628 = sand.u32 %s160, 1
          %s1629 = scalar_lea.sflag [#allocation3], %s1628
          %s1630 = sand.u32 %s160, 1
          %s1631 = smul.addr %s1630, 256
          %s1632 = scalar_lea.vmem [#allocation2], %s1631
          %1634 = dma.done %s1629, 4096
        $region56: #{tpu_custom_call.1} parent=51 // pred_fallthru
          _
      $region52: #{tpu_custom_call.1} parent=5 // pred_fallthru
        _
    $region6: #{tpu_custom_call.1} parent=1 // loop_footer
      %s19 = sadd.s32 1, %s15
    $region7: #{tpu_custom_call.1} parent=1 // loop_footer_branch
      %14 = sbr.rel target = $region3
    $region8: #{tpu_custom_call.1} parent=1 // loop_exit
      _
    %1635 = vsyncpa [#allocation3], 1
    %s1636 = scalar_lea.sflag [#allocation3], 1
    %1637 = vsyncpa %s1636, 1

</llo_original>
